<compile_context>
chip_gen: v6e
topology: v6e:2x2x1
jax: 0.10.0
libtpu: 0.0.40
codegen_flags: <defaults>
</compile_context>

<pallas_src>
import math
import functools

import jax
import jax.numpy as jnp
from jax.experimental import pallas as pl
from jax.experimental.pallas import tpu as pltpu


# ---------------------------------------------------------------------------
# VMEM budgeting (generation-aware: query the chip, fall back to the smallest
# production budget -- v7x has 64 MiB per TensorCore, so the fallback is safe
# on every generation).
# ---------------------------------------------------------------------------
def _vmem_budget_bytes():
    try:
        cap = pltpu.get_tpu_info().vmem_capacity_bytes
    except Exception:
        cap = 64 << 20
    return int(cap * 3 // 4)


def _pick_hidden_tile(dim, hidden_dim, budget_bytes):
    # Streamed working set per unit of tile_h: w1/w2 (dim, th) + w3 (th, dim)
    # in bf16, double-buffered, plus the two bias tiles.  Keep streamed weights
    # under half the budget so activations / accumulator have headroom.
    per_h = 3 * dim * 2 * 2 + 2 * 2 * 2
    for cand in (4096, 2048, 1024, 512, 256, 128):
        if hidden_dim % cand == 0 and cand * per_h <= budget_bytes // 2:
            return cand
    for cand in (512, 256, 128):
        if hidden_dim % cand == 0:
            return cand
    return hidden_dim  # toy shapes: full extent (no (8,128) constraint)


def _pick_m_tile(m_total):
    for cand in (512, 256, 128, 64, 32, 16, 8):
        if m_total % cand == 0:
            return cand
    return m_total


# ---------------------------------------------------------------------------
# Kernel 1: RMSNorm1 + MLA attention + residual + RMSNorm2   (grid = (batch,))
# ---------------------------------------------------------------------------
def _attn_kernel(x_ref, g1_ref, g2_ref, wq_ref, wka_ref, wkb_ref, wva_ref,
                 wvb_ref, wo_ref, x1_ref, y2_ref, attn_scr,
                 *, num_heads, head_dim):
    x = x_ref[...].astype(jnp.float32)                           # (seq, dim)

    # RMSNorm 1 (matches PyTorch: no eps).  rsqrt -> EUP slot.
    inv1 = jax.lax.rsqrt(jnp.mean(x * x, axis=-1, keepdims=True))
    y = (x * inv1 * g1_ref[...]).astype(jnp.bfloat16)

    # MLA projections (latent K/V path): bf16 operands, fp32 accumulation.
    q = jnp.dot(y, wq_ref[...], preferred_element_type=jnp.float32)
    k_lat = jnp.dot(y, wka_ref[...], preferred_element_type=jnp.float32)
    k = jnp.dot(k_lat.astype(jnp.bfloat16), wkb_ref[...],
                preferred_element_type=jnp.float32)
    v_lat = jnp.dot(y, wva_ref[...], preferred_element_type=jnp.float32)
    v = jnp.dot(v_lat.astype(jnp.bfloat16), wvb_ref[...],
                preferred_element_type=jnp.float32)

    scale = 1.0 / math.sqrt(head_dim)
    qb = (q * scale).astype(jnp.bfloat16)          # fold softmax scale into q
    kb = k.astype(jnp.bfloat16)
    vb = v.astype(jnp.bfloat16)

    # Per-head attention; each head's bf16 context goes into one lane-contiguous
    # bf16 (seq, H*hd) scratch so the output projection is a single MXU matmul.
    # TODO(synk): for production head counts / seq, move heads onto a grid axis
    # (head_dim=128 lanes -> unmasked stores, full MXU) and use a flash-style
    # online softmax over KV tiles instead of full (seq, seq) fp32 logits.
    for h in range(num_heads):
        lo = h * head_dim
        qh = qb[:, lo:lo + head_dim]
        kh = kb[:, lo:lo + head_dim]
        vh = vb[:, lo:lo + head_dim]
        logits = jax.lax.dot_general(                 # q @ k^T, NT contraction
            qh, kh, (((1,), (1,)), ((), ())),
            preferred_element_type=jnp.float32)
        logits = logits - jnp.max(logits, axis=-1, keepdims=True)
        p = jnp.exp(logits)
        p = p * pl.reciprocal(jnp.sum(p, axis=-1, keepdims=True), approx=True)
        ctx = jnp.dot(p.astype(jnp.bfloat16), vh,
                      preferred_element_type=jnp.float32)
        attn_scr[:, lo:lo + head_dim] = ctx.astype(jnp.bfloat16)

    # Single fused output projection over all heads (bf16 x bf16 -> fp32).
    attn_out = jnp.dot(attn_scr[...], wo_ref[...],
                       preferred_element_type=jnp.float32)

    x1 = x + attn_out                                            # residual 1
    x1_ref[...] = x1.astype(x1_ref.dtype)

    # RMSNorm 2 -> bf16 activations consumed by the MLP kernel.
    inv2 = jax.lax.rsqrt(jnp.mean(x1 * x1, axis=-1, keepdims=True))
    y2_ref[...] = (x1 * inv2 * g2_ref[...]).astype(y2_ref.dtype)


# ---------------------------------------------------------------------------
# Kernel 2: SwiGLU MLP + residual    (grid = (m_tiles, hidden_tiles))
# Batch folded into the matmul M dimension; hidden axis is the reduction axis
# with an fp32 VMEM accumulator.
# ---------------------------------------------------------------------------
def _mlp_kernel(y2_ref, x1_ref, w1_ref, b1_ref, w2_ref, b2_ref, w3_ref, b3_ref,
                o_ref, acc_ref):
    h_tile = pl.program_id(1)

    @pl.when(h_tile == 0)
    def _init():
        # residual + final bias, added exactly once per M tile.
        acc_ref[...] = x1_ref[...] + b3_ref[...]

    y2 = y2_ref[...]                                             # (tm, dim) bf16
    gate = jnp.dot(y2, w1_ref[...], preferred_element_type=jnp.float32) + b1_ref[...]
    gate = gate * jax.nn.sigmoid(gate)                           # SiLU (fp32, EUP)
    up = jnp.dot(y2, w2_ref[...], preferred_element_type=jnp.float32) + b2_ref[...]
    hidden = (gate * up).astype(jnp.bfloat16)
    acc_ref[...] += jnp.dot(hidden, w3_ref[...], preferred_element_type=jnp.float32)

    @pl.when(h_tile == pl.num_programs(1) - 1)
    def _finalize():
        o_ref[...] = acc_ref[...].astype(o_ref.dtype)            # residual 2


# ---------------------------------------------------------------------------
# Wrapper
# ---------------------------------------------------------------------------
def encoder_layer_pallas(x, params, *, num_heads, head_dim):
    bs, seq, dim = x.shape
    latent_dim = params["wka"].shape[1]
    hidden_dim = params["w1"].shape[1]
    hh = num_heads * head_dim

    budget = _vmem_budget_bytes()
    tile_h = _pick_hidden_tile(dim, hidden_dim, budget)
    n_h_tiles = hidden_dim // tile_h
    m_total = bs * seq
    tile_m = _pick_m_tile(m_total)
    n_m_tiles = m_total // tile_m

    bf16 = jnp.bfloat16
    # Pre-cast all matmul weights to bf16 once on the host.
    wq = params["wq"].astype(bf16)
    wka = params["wka"].astype(bf16)
    wkb = params["wkb"].astype(bf16)
    wva = params["wva"].astype(bf16)
    wvb = params["wvb"].astype(bf16)
    wo = params["wo"].astype(bf16)
    w1 = params["w1"].astype(bf16)
    w2 = params["w2"].astype(bf16)
    w3 = params["w3"].astype(bf16)

    # ------------------ call 1: attention (grid over batch) -----------------
    def aconst(shape):
        return pl.BlockSpec(shape, lambda b: (0,) * len(shape))

    attn_in_specs = [
        pl.BlockSpec((None, seq, dim), lambda b: (b, 0, 0)),     # x (per batch)
        aconst((1, dim)),                                        # gamma1
        aconst((1, dim)),                                        # gamma2
        aconst((dim, hh)),                                       # wq^T
        aconst((dim, latent_dim)),                               # wk_a^T
        aconst((latent_dim, hh)),                                # wk_b^T
        aconst((dim, latent_dim)),                               # wv_a^T
        aconst((latent_dim, hh)),                                # wv_b^T
        aconst((hh, dim)),                                       # wo^T
    ]
    attn_out_specs = [
        pl.BlockSpec((None, seq, dim), lambda b: (b, 0, 0)),     # x1 (fp32)
        pl.BlockSpec((None, seq, dim), lambda b: (b, 0, 0)),     # y2 (bf16)
    ]
    attn_kernel = functools.partial(
        _attn_kernel, num_heads=num_heads, head_dim=head_dim)

    x1, y2 = pl.pallas_call(
        attn_kernel,
        out_shape=(jax.ShapeDtypeStruct((bs, seq, dim), jnp.float32),
                   jax.ShapeDtypeStruct((bs, seq, dim), bf16)),
        grid_spec=pltpu.PrefetchScalarGridSpec(
            num_scalar_prefetch=0,
            grid=(bs,),
            in_specs=attn_in_specs,
            out_specs=attn_out_specs,
            scratch_shapes=[pltpu.VMEM((seq, hh), bf16)],        # bf16 head outs
        ),
        compiler_params=pltpu.CompilerParams(
            dimension_semantics=("parallel",),
            vmem_limit_bytes=budget,
        ),
    )(x, params["g1"], params["g2"], wq, wka, wkb, wva, wvb, wo)

    # --------- call 2: SwiGLU MLP (batch folded into the M dimension) -------
    y2f = y2.reshape(m_total, dim)
    x1f = x1.reshape(m_total, dim)

    mlp_in_specs = [
        pl.BlockSpec((tile_m, dim), lambda m, h: (m, 0)),        # y2 tile
        pl.BlockSpec((tile_m, dim), lambda m, h: (m, 0)),        # x1 tile (residual)
        pl.BlockSpec((dim, tile_h), lambda m, h: (0, h)),        # w1^T tile
        pl.BlockSpec((1, tile_h), lambda m, h: (0, h)),          # b1 tile
        pl.BlockSpec((dim, tile_h), lambda m, h: (0, h)),        # w2^T tile
        pl.BlockSpec((1, tile_h), lambda m, h: (0, h)),          # b2 tile
        pl.BlockSpec((tile_h, dim), lambda m, h: (h, 0)),        # w3^T tile
        pl.BlockSpec((1, dim), lambda m, h: (0, 0)),             # b3
    ]

    out = pl.pallas_call(
        _mlp_kernel,
        out_shape=jax.ShapeDtypeStruct((m_total, dim), x.dtype),
        grid_spec=pltpu.PrefetchScalarGridSpec(
            num_scalar_prefetch=0,
            grid=(n_m_tiles, n_h_tiles),
            in_specs=mlp_in_specs,
            out_specs=pl.BlockSpec((tile_m, dim), lambda m, h: (m, 0)),
            scratch_shapes=[pltpu.VMEM((tile_m, dim), jnp.float32)],
        ),
        compiler_params=pltpu.CompilerParams(
            dimension_semantics=("parallel", "arbitrary"),
            vmem_limit_bytes=budget,
        ),
    )(y2f, x1f, w1, params["b1"], w2, params["b2"], w3, params["b3"])

    return out.reshape(bs, seq, dim)


# ---------------------------------------------------------------------------
# Pure-JAX fp32 reference mirroring the PyTorch forward
# (mask=None, start_pos=0, freqs_complex=None, ssmax=False, dropout=0).
# ---------------------------------------------------------------------------
def encoder_layer_ref(x, params, *, num_heads, head_dim):
    def rmsnorm(z, g):
        rms = jnp.sqrt(jnp.mean(z * z, axis=-1, keepdims=True))
        return g * (z / rms)

    bs, seq, dim = x.shape
    y = rmsnorm(x, params["g1"][0])
    q = y @ params["wq"]
    k = (y @ params["wka"]) @ params["wkb"]
    v = (y @ params["wva"]) @ params["wvb"]
    q = q.reshape(bs, seq, num_heads, head_dim).transpose(0, 2, 1, 3)
    k = k.reshape(bs, seq, num_heads, head_dim).transpose(0, 2, 1, 3)
    v = v.reshape(bs, seq, num_heads, head_dim).transpose(0, 2, 1, 3)
    logits = jnp.einsum("bhqd,bhkd->bhqk", q, k) / math.sqrt(head_dim)
    attn = jax.nn.softmax(logits, axis=-1)
    out = jnp.einsum("bhqk,bhkd->bhqd", attn, v)
    out = out.transpose(0, 2, 1, 3).reshape(bs, seq, num_heads * head_dim)
    x1 = x + out @ params["wo"]
    y2 = rmsnorm(x1, params["g2"][0])
    gate = y2 @ params["w1"] + params["b1"][0]
    gate = gate * jax.nn.sigmoid(gate)
    up = y2 @ params["w2"] + params["b2"][0]
    mlp = (gate * up) @ params["w3"] + params["b3"][0]
    return x1 + mlp


def init_params(key, dim, num_heads, latent_dim, hidden_dim):
    head_dim = dim // num_heads
    ks = jax.random.split(key, 10)
    n = lambda k, shape: (0.1 * jax.random.normal(k, shape)).astype(jnp.float32)
    return {
        "g1": jnp.ones((1, dim), jnp.float32),
        "g2": jnp.ones((1, dim), jnp.float32),
        "wq": n(ks[0], (dim, num_heads * head_dim)),
        "wka": n(ks[1], (dim, latent_dim)),
        "wkb": n(ks[2], (latent_dim, num_heads * head_dim)),
        "wva": n(ks[3], (dim, latent_dim)),
        "wvb": n(ks[4], (latent_dim, num_heads * head_dim)),
        "wo": n(ks[5], (num_heads * head_dim, dim)),
        "w1": n(ks[6], (dim, hidden_dim)),
        "b1": n(ks[7], (1, hidden_dim)),
        "w2": n(ks[8], (dim, hidden_dim)),
        "b2": n(ks[9], (1, hidden_dim)),
        "w3": n(jax.random.fold_in(key, 100), (hidden_dim, dim)),
        "b3": n(jax.random.fold_in(key, 101), (1, dim)),
    }


if __name__ == "__main__":
    # Small shapes consistent with the module (dropout=0.0, ssmax=False,
    # mask=None, start_pos=0, freqs_complex=None, use_cache path inert).
    bs, seq, dim = 2, 8, 32
    num_heads, latent_dim, hidden_dim = 4, 16, 64
    head_dim = dim // num_heads
    # TODO(synk): decoupled RoPE (freqs_complex) and the KV-cache decode path
    # (start_pos>0) are not exercised by the default forward and are omitted.

    key = jax.random.PRNGKey(0)
    kx, kp = jax.random.split(key)
    x = jax.random.normal(kx, (bs, seq, dim), jnp.float32)
    params = init_params(kp, dim, num_heads, latent_dim, hidden_dim)

    out = encoder_layer_pallas(x, params, num_heads=num_heads, head_dim=head_dim)
    out = jax.block_until_ready(out)

    ref = encoder_layer_ref(x, params, num_heads=num_heads, head_dim=head_dim)
    assert out.shape == (bs, seq, dim)
    # Kernel uses bf16 matmul operands / bf16 y2 hand-off (fp32 accumulation);
    # compare against the fp32 reference with a loosened tolerance.
    assert jnp.allclose(out, ref, atol=3e-2, rtol=3e-2), "mismatch vs JAX reference"

    print("KERNEL_OK")
</pallas_src>

<mosaic_0001>
module attributes {stable_mosaic.version = 11 : i64} {
  func.func @_attn_kernel(%arg0: i32, %arg1: memref<1x8x32xf32, #tpu.memory_space<vmem>>, %arg2: memref<1x32xf32, #tpu.memory_space<vmem>>, %arg3: memref<1x32xf32, #tpu.memory_space<vmem>>, %arg4: memref<32x32xbf16, #tpu.memory_space<vmem>>, %arg5: memref<32x16xbf16, #tpu.memory_space<vmem>>, %arg6: memref<16x32xbf16, #tpu.memory_space<vmem>>, %arg7: memref<32x16xbf16, #tpu.memory_space<vmem>>, %arg8: memref<16x32xbf16, #tpu.memory_space<vmem>>, %arg9: memref<32x32xbf16, #tpu.memory_space<vmem>>, %arg10: memref<1x8x32xf32, #tpu.memory_space<vmem>>, %arg11: memref<1x8x32xbf16, #tpu.memory_space<vmem>>, %arg12: memref<8x32xbf16, #tpu.memory_space<vmem>>) attributes {dimension_semantics = [#tpu.dimension_semantics<parallel>], iteration_bounds = array<i64: 2>, scalar_prefetch = 0 : i64, scratch_operands = 1 : i64, tpu.core_type = #tpu.core_type<tc>, window_params = [{transform_indices = @transform_0, window_bounds = array<i64: 1, 8, 32>}, {pipeline_mode = #tpu.pipeline_mode<synchronous>, transform_indices = @transform_1, window_bounds = array<i64: 1, 32>}, {pipeline_mode = #tpu.pipeline_mode<synchronous>, transform_indices = @transform_2, window_bounds = array<i64: 1, 32>}, {pipeline_mode = #tpu.pipeline_mode<synchronous>, transform_indices = @transform_3, window_bounds = array<i64: 32, 32>}, {pipeline_mode = #tpu.pipeline_mode<synchronous>, transform_indices = @transform_4, window_bounds = array<i64: 32, 16>}, {pipeline_mode = #tpu.pipeline_mode<synchronous>, transform_indices = @transform_5, window_bounds = array<i64: 16, 32>}, {pipeline_mode = #tpu.pipeline_mode<synchronous>, transform_indices = @transform_6, window_bounds = array<i64: 32, 16>}, {pipeline_mode = #tpu.pipeline_mode<synchronous>, transform_indices = @transform_7, window_bounds = array<i64: 16, 32>}, {pipeline_mode = #tpu.pipeline_mode<synchronous>, transform_indices = @transform_8, window_bounds = array<i64: 32, 32>}, {transform_indices = @transform_9, window_bounds = array<i64: 1, 8, 32>}, {transform_indices = @transform_10, window_bounds = array<i64: 1, 8, 32>}]} {
    %c0 = arith.constant 0 : index
    %c0_0 = arith.constant 0 : index
    %c0_1 = arith.constant 0 : index
    %0 = vector.load %arg1[%c0, %c0_0, %c0_1] : memref<1x8x32xf32, #tpu.memory_space<vmem>>, vector<1x8x32xf32>
    %1 = vector.shape_cast %0 : vector<1x8x32xf32> to vector<8x32xf32>
    %2 = arith.mulf %1, %1 : vector<8x32xf32>
    %cst = arith.constant dense<0.000000e+00> : vector<8xf32>
    %3 = vector.multi_reduction <add>, %2, %cst [1] : vector<8x32xf32> to vector<8xf32>
    %4 = vector.shape_cast %3 : vector<8xf32> to vector<8x1xf32>
    %cst_2 = arith.constant 3.200000e+01 : f32
    %5 = vector.broadcast %cst_2 : f32 to vector<8x1xf32>
    %6 = arith.divf %4, %5 : vector<8x1xf32>
    %7 = math.rsqrt %6 : vector<8x1xf32>
    %8 = vector.broadcast %7 : vector<8x1xf32> to vector<8x32xf32>
    %9 = arith.mulf %1, %8 : vector<8x32xf32>
    %c0_3 = arith.constant 0 : index
    %c0_4 = arith.constant 0 : index
    %10 = vector.load %arg2[%c0_3, %c0_4] : memref<1x32xf32, #tpu.memory_space<vmem>>, vector<1x32xf32>
    %11 = vector.broadcast %10 : vector<1x32xf32> to vector<8x32xf32>
    %12 = arith.mulf %9, %11 : vector<8x32xf32>
    %13 = arith.truncf %12 : vector<8x32xf32> to vector<8x32xbf16>
    %c0_5 = arith.constant 0 : index
    %c0_6 = arith.constant 0 : index
    %14 = vector.load %arg4[%c0_5, %c0_6] : memref<32x32xbf16, #tpu.memory_space<vmem>>, vector<32x32xbf16>
    %cst_7 = arith.constant dense<0.000000e+00> : vector<8x32xf32>
    %15 = tpu.matmul %13, %14, %cst_7 {dimension_numbers = #tpu.dot_dimension_numbers<[1], [0], [0], [1], [0, 0, 1, 1], [], []>} : vector<8x32xbf16>, vector<32x32xbf16>, vector<8x32xf32> -> vector<8x32xf32>
    %c0_8 = arith.constant 0 : index
    %c0_9 = arith.constant 0 : index
    %16 = vector.load %arg5[%c0_8, %c0_9] : memref<32x16xbf16, #tpu.memory_space<vmem>>, vector<32x16xbf16>
    %cst_10 = arith.constant dense<0.000000e+00> : vector<8x16xf32>
    %17 = tpu.matmul %13, %16, %cst_10 {dimension_numbers = #tpu.dot_dimension_numbers<[1], [0], [0], [1], [0, 0, 1, 1], [], []>} : vector<8x32xbf16>, vector<32x16xbf16>, vector<8x16xf32> -> vector<8x16xf32>
    %18 = arith.truncf %17 : vector<8x16xf32> to vector<8x16xbf16>
    %c0_11 = arith.constant 0 : index
    %c0_12 = arith.constant 0 : index
    %19 = vector.load %arg6[%c0_11, %c0_12] : memref<16x32xbf16, #tpu.memory_space<vmem>>, vector<16x32xbf16>
    %cst_13 = arith.constant dense<0.000000e+00> : vector<8x32xf32>
    %20 = tpu.matmul %18, %19, %cst_13 {dimension_numbers = #tpu.dot_dimension_numbers<[1], [0], [0], [1], [0, 0, 1, 1], [], []>} : vector<8x16xbf16>, vector<16x32xbf16>, vector<8x32xf32> -> vector<8x32xf32>
    %c0_14 = arith.constant 0 : index
    %c0_15 = arith.constant 0 : index
    %21 = vector.load %arg7[%c0_14, %c0_15] : memref<32x16xbf16, #tpu.memory_space<vmem>>, vector<32x16xbf16>
    %cst_16 = arith.constant dense<0.000000e+00> : vector<8x16xf32>
    %22 = tpu.matmul %13, %21, %cst_16 {dimension_numbers = #tpu.dot_dimension_numbers<[1], [0], [0], [1], [0, 0, 1, 1], [], []>} : vector<8x32xbf16>, vector<32x16xbf16>, vector<8x16xf32> -> vector<8x16xf32>
    %23 = arith.truncf %22 : vector<8x16xf32> to vector<8x16xbf16>
    %c0_17 = arith.constant 0 : index
    %c0_18 = arith.constant 0 : index
    %24 = vector.load %arg8[%c0_17, %c0_18] : memref<16x32xbf16, #tpu.memory_space<vmem>>, vector<16x32xbf16>
    %cst_19 = arith.constant dense<0.000000e+00> : vector<8x32xf32>
    %25 = tpu.matmul %23, %24, %cst_19 {dimension_numbers = #tpu.dot_dimension_numbers<[1], [0], [0], [1], [0, 0, 1, 1], [], []>} : vector<8x16xbf16>, vector<16x32xbf16>, vector<8x32xf32> -> vector<8x32xf32>
    %cst_20 = arith.constant 0.353553385 : f32
    %26 = vector.broadcast %cst_20 : f32 to vector<8x32xf32>
    %27 = arith.mulf %15, %26 : vector<8x32xf32>
    %28 = arith.truncf %27 : vector<8x32xf32> to vector<8x32xbf16>
    %29 = arith.truncf %20 : vector<8x32xf32> to vector<8x32xbf16>
    %30 = arith.truncf %25 : vector<8x32xf32> to vector<8x32xbf16>
    %31 = vector.extract_strided_slice %28 {offsets = [0, 0], sizes = [8, 8], strides = [1, 1]} : vector<8x32xbf16> to vector<8x8xbf16>
    %32 = vector.extract_strided_slice %29 {offsets = [0, 0], sizes = [8, 8], strides = [1, 1]} : vector<8x32xbf16> to vector<8x8xbf16>
    %33 = vector.extract_strided_slice %30 {offsets = [0, 0], sizes = [8, 8], strides = [1, 1]} : vector<8x32xbf16> to vector<8x8xbf16>
    %cst_21 = arith.constant dense<0.000000e+00> : vector<8x8xf32>
    %34 = tpu.matmul %31, %32, %cst_21 {dimension_numbers = #tpu.dot_dimension_numbers<[1], [1], [0], [0], [0, 0, 1, 0], [], []>} : vector<8x8xbf16>, vector<8x8xbf16>, vector<8x8xf32> -> vector<8x8xf32>
    %cst_22 = arith.constant dense<0xFF800000> : vector<8xf32>
    %35 = vector.multi_reduction <maximumf>, %34, %cst_22 [1] : vector<8x8xf32> to vector<8xf32>
    %36 = vector.shape_cast %35 : vector<8xf32> to vector<8x1xf32>
    %37 = vector.broadcast %36 : vector<8x1xf32> to vector<8x8xf32>
    %38 = arith.subf %34, %37 : vector<8x8xf32>
    %39 = math.exp %38 : vector<8x8xf32>
    %cst_23 = arith.constant dense<0.000000e+00> : vector<8xf32>
    %40 = vector.multi_reduction <add>, %39, %cst_23 [1] : vector<8x8xf32> to vector<8xf32>
    %41 = vector.shape_cast %40 : vector<8xf32> to vector<8x1xf32>
    %42 = tpu.reciprocal %41 {approx = true} : vector<8x1xf32> -> vector<8x1xf32>
    %43 = vector.broadcast %42 : vector<8x1xf32> to vector<8x8xf32>
    %44 = arith.mulf %39, %43 : vector<8x8xf32>
    %45 = arith.truncf %44 : vector<8x8xf32> to vector<8x8xbf16>
    %cst_24 = arith.constant dense<0.000000e+00> : vector<8x8xf32>
    %46 = tpu.matmul %45, %33, %cst_24 {dimension_numbers = #tpu.dot_dimension_numbers<[1], [0], [0], [1], [0, 0, 1, 1], [], []>} : vector<8x8xbf16>, vector<8x8xbf16>, vector<8x8xf32> -> vector<8x8xf32>
    %47 = arith.truncf %46 : vector<8x8xf32> to vector<8x8xbf16>
    %c0_25 = arith.constant 0 : index
    %c0_26 = arith.constant 0 : index
    %48 = vector.load %arg12[%c0_25, %c0_26] : memref<8x32xbf16, #tpu.memory_space<vmem>>, vector<8x8xbf16>
    tpu.vector_store %arg12[%c0_25, %c0_26], %47 {strides = array<i32>} : memref<8x32xbf16, #tpu.memory_space<vmem>>, vector<8x8xbf16>,
    %49 = vector.extract_strided_slice %28 {offsets = [0, 8], sizes = [8, 8], strides = [1, 1]} : vector<8x32xbf16> to vector<8x8xbf16>
    %50 = vector.extract_strided_slice %29 {offsets = [0, 8], sizes = [8, 8], strides = [1, 1]} : vector<8x32xbf16> to vector<8x8xbf16>
    %51 = vector.extract_strided_slice %30 {offsets = [0, 8], sizes = [8, 8], strides = [1, 1]} : vector<8x32xbf16> to vector<8x8xbf16>
    %cst_27 = arith.constant dense<0.000000e+00> : vector<8x8xf32>
    %52 = tpu.matmul %49, %50, %cst_27 {dimension_numbers = #tpu.dot_dimension_numbers<[1], [1], [0], [0], [0, 0, 1, 0], [], []>} : vector<8x8xbf16>, vector<8x8xbf16>, vector<8x8xf32> -> vector<8x8xf32>
    %cst_28 = arith.constant dense<0xFF800000> : vector<8xf32>
    %53 = vector.multi_reduction <maximumf>, %52, %cst_28 [1] : vector<8x8xf32> to vector<8xf32>
    %54 = vector.shape_cast %53 : vector<8xf32> to vector<8x1xf32>
    %55 = vector.broadcast %54 : vector<8x1xf32> to vector<8x8xf32>
    %56 = arith.subf %52, %55 : vector<8x8xf32>
    %57 = math.exp %56 : vector<8x8xf32>
    %cst_29 = arith.constant dense<0.000000e+00> : vector<8xf32>
    %58 = vector.multi_reduction <add>, %57, %cst_29 [1] : vector<8x8xf32> to vector<8xf32>
    %59 = vector.shape_cast %58 : vector<8xf32> to vector<8x1xf32>
    %60 = tpu.reciprocal %59 {approx = true} : vector<8x1xf32> -> vector<8x1xf32>
    %61 = vector.broadcast %60 : vector<8x1xf32> to vector<8x8xf32>
    %62 = arith.mulf %57, %61 : vector<8x8xf32>
    %63 = arith.truncf %62 : vector<8x8xf32> to vector<8x8xbf16>
    %cst_30 = arith.constant dense<0.000000e+00> : vector<8x8xf32>
    %64 = tpu.matmul %63, %51, %cst_30 {dimension_numbers = #tpu.dot_dimension_numbers<[1], [0], [0], [1], [0, 0, 1, 1], [], []>} : vector<8x8xbf16>, vector<8x8xbf16>, vector<8x8xf32> -> vector<8x8xf32>
    %65 = arith.truncf %64 : vector<8x8xf32> to vector<8x8xbf16>
    %c0_31 = arith.constant 0 : index
    %c8 = arith.constant 8 : index
    %66 = vector.load %arg12[%c0_31, %c8] : memref<8x32xbf16, #tpu.memory_space<vmem>>, vector<8x8xbf16>
    tpu.vector_store %arg12[%c0_31, %c8], %65 {strides = array<i32>} : memref<8x32xbf16, #tpu.memory_space<vmem>>, vector<8x8xbf16>,
    %67 = vector.extract_strided_slice %28 {offsets = [0, 16], sizes = [8, 8], strides = [1, 1]} : vector<8x32xbf16> to vector<8x8xbf16>
    %68 = vector.extract_strided_slice %29 {offsets = [0, 16], sizes = [8, 8], strides = [1, 1]} : vector<8x32xbf16> to vector<8x8xbf16>
    %69 = vector.extract_strided_slice %30 {offsets = [0, 16], sizes = [8, 8], strides = [1, 1]} : vector<8x32xbf16> to vector<8x8xbf16>
    %cst_32 = arith.constant dense<0.000000e+00> : vector<8x8xf32>
    %70 = tpu.matmul %67, %68, %cst_32 {dimension_numbers = #tpu.dot_dimension_numbers<[1], [1], [0], [0], [0, 0, 1, 0], [], []>} : vector<8x8xbf16>, vector<8x8xbf16>, vector<8x8xf32> -> vector<8x8xf32>
    %cst_33 = arith.constant dense<0xFF800000> : vector<8xf32>
    %71 = vector.multi_reduction <maximumf>, %70, %cst_33 [1] : vector<8x8xf32> to vector<8xf32>
    %72 = vector.shape_cast %71 : vector<8xf32> to vector<8x1xf32>
    %73 = vector.broadcast %72 : vector<8x1xf32> to vector<8x8xf32>
    %74 = arith.subf %70, %73 : vector<8x8xf32>
    %75 = math.exp %74 : vector<8x8xf32>
    %cst_34 = arith.constant dense<0.000000e+00> : vector<8xf32>
    %76 = vector.multi_reduction <add>, %75, %cst_34 [1] : vector<8x8xf32> to vector<8xf32>
    %77 = vector.shape_cast %76 : vector<8xf32> to vector<8x1xf32>
    %78 = tpu.reciprocal %77 {approx = true} : vector<8x1xf32> -> vector<8x1xf32>
    %79 = vector.broadcast %78 : vector<8x1xf32> to vector<8x8xf32>
    %80 = arith.mulf %75, %79 : vector<8x8xf32>
    %81 = arith.truncf %80 : vector<8x8xf32> to vector<8x8xbf16>
    %cst_35 = arith.constant dense<0.000000e+00> : vector<8x8xf32>
    %82 = tpu.matmul %81, %69, %cst_35 {dimension_numbers = #tpu.dot_dimension_numbers<[1], [0], [0], [1], [0, 0, 1, 1], [], []>} : vector<8x8xbf16>, vector<8x8xbf16>, vector<8x8xf32> -> vector<8x8xf32>
    %83 = arith.truncf %82 : vector<8x8xf32> to vector<8x8xbf16>
    %c0_36 = arith.constant 0 : index
    %c16 = arith.constant 16 : index
    %84 = vector.load %arg12[%c0_36, %c16] : memref<8x32xbf16, #tpu.memory_space<vmem>>, vector<8x8xbf16>
    tpu.vector_store %arg12[%c0_36, %c16], %83 {strides = array<i32>} : memref<8x32xbf16, #tpu.memory_space<vmem>>, vector<8x8xbf16>,
    %85 = vector.extract_strided_slice %28 {offsets = [0, 24], sizes = [8, 8], strides = [1, 1]} : vector<8x32xbf16> to vector<8x8xbf16>
    %86 = vector.extract_strided_slice %29 {offsets = [0, 24], sizes = [8, 8], strides = [1, 1]} : vector<8x32xbf16> to vector<8x8xbf16>
    %87 = vector.extract_strided_slice %30 {offsets = [0, 24], sizes = [8, 8], strides = [1, 1]} : vector<8x32xbf16> to vector<8x8xbf16>
    %cst_37 = arith.constant dense<0.000000e+00> : vector<8x8xf32>
    %88 = tpu.matmul %85, %86, %cst_37 {dimension_numbers = #tpu.dot_dimension_numbers<[1], [1], [0], [0], [0, 0, 1, 0], [], []>} : vector<8x8xbf16>, vector<8x8xbf16>, vector<8x8xf32> -> vector<8x8xf32>
    %cst_38 = arith.constant dense<0xFF800000> : vector<8xf32>
    %89 = vector.multi_reduction <maximumf>, %88, %cst_38 [1] : vector<8x8xf32> to vector<8xf32>
    %90 = vector.shape_cast %89 : vector<8xf32> to vector<8x1xf32>
    %91 = vector.broadcast %90 : vector<8x1xf32> to vector<8x8xf32>
    %92 = arith.subf %88, %91 : vector<8x8xf32>
    %93 = math.exp %92 : vector<8x8xf32>
    %cst_39 = arith.constant dense<0.000000e+00> : vector<8xf32>
    %94 = vector.multi_reduction <add>, %93, %cst_39 [1] : vector<8x8xf32> to vector<8xf32>
    %95 = vector.shape_cast %94 : vector<8xf32> to vector<8x1xf32>
    %96 = tpu.reciprocal %95 {approx = true} : vector<8x1xf32> -> vector<8x1xf32>
    %97 = vector.broadcast %96 : vector<8x1xf32> to vector<8x8xf32>
    %98 = arith.mulf %93, %97 : vector<8x8xf32>
    %99 = arith.truncf %98 : vector<8x8xf32> to vector<8x8xbf16>
    %cst_40 = arith.constant dense<0.000000e+00> : vector<8x8xf32>
    %100 = tpu.matmul %99, %87, %cst_40 {dimension_numbers = #tpu.dot_dimension_numbers<[1], [0], [0], [1], [0, 0, 1, 1], [], []>} : vector<8x8xbf16>, vector<8x8xbf16>, vector<8x8xf32> -> vector<8x8xf32>
    %101 = arith.truncf %100 : vector<8x8xf32> to vector<8x8xbf16>
    %c0_41 = arith.constant 0 : index
    %c24 = arith.constant 24 : index
    %102 = vector.load %arg12[%c0_41, %c24] : memref<8x32xbf16, #tpu.memory_space<vmem>>, vector<8x8xbf16>
    tpu.vector_store %arg12[%c0_41, %c24], %101 {strides = array<i32>} : memref<8x32xbf16, #tpu.memory_space<vmem>>, vector<8x8xbf16>,
    %c0_42 = arith.constant 0 : index
    %c0_43 = arith.constant 0 : index
    %103 = vector.load %arg12[%c0_42, %c0_43] : memref<8x32xbf16, #tpu.memory_space<vmem>>, vector<8x32xbf16>
    %c0_44 = arith.constant 0 : index
    %c0_45 = arith.constant 0 : index
    %104 = vector.load %arg9[%c0_44, %c0_45] : memref<32x32xbf16, #tpu.memory_space<vmem>>, vector<32x32xbf16>
    %cst_46 = arith.constant dense<0.000000e+00> : vector<8x32xf32>
    %105 = tpu.matmul %103, %104, %cst_46 {dimension_numbers = #tpu.dot_dimension_numbers<[1], [0], [0], [1], [0, 0, 1, 1], [], []>} : vector<8x32xbf16>, vector<32x32xbf16>, vector<8x32xf32> -> vector<8x32xf32>
    %106 = arith.addf %1, %105 : vector<8x32xf32>
    %c0_47 = arith.constant 0 : index
    %c0_48 = arith.constant 0 : index
    %c0_49 = arith.constant 0 : index
    %107 = vector.load %arg10[%c0_47, %c0_48, %c0_49] : memref<1x8x32xf32, #tpu.memory_space<vmem>>, vector<1x8x32xf32>
    %108 = vector.shape_cast %107 : vector<1x8x32xf32> to vector<8x32xf32>
    %109 = vector.shape_cast %106 : vector<8x32xf32> to vector<1x8x32xf32>
    tpu.vector_store %arg10[%c0_47, %c0_48, %c0_49], %109 {strides = array<i32>} : memref<1x8x32xf32, #tpu.memory_space<vmem>>, vector<1x8x32xf32>,
    %110 = arith.mulf %106, %106 : vector<8x32xf32>
    %cst_50 = arith.constant dense<0.000000e+00> : vector<8xf32>
    %111 = vector.multi_reduction <add>, %110, %cst_50 [1] : vector<8x32xf32> to vector<8xf32>
    %112 = vector.shape_cast %111 : vector<8xf32> to vector<8x1xf32>
    %cst_51 = arith.constant 3.200000e+01 : f32
    %113 = vector.broadcast %cst_51 : f32 to vector<8x1xf32>
    %114 = arith.divf %112, %113 : vector<8x1xf32>
    %115 = math.rsqrt %114 : vector<8x1xf32>
    %116 = vector.broadcast %115 : vector<8x1xf32> to vector<8x32xf32>
    %117 = arith.mulf %106, %116 : vector<8x32xf32>
    %c0_52 = arith.constant 0 : index
    %c0_53 = arith.constant 0 : index
    %118 = vector.load %arg3[%c0_52, %c0_53] : memref<1x32xf32, #tpu.memory_space<vmem>>, vector<1x32xf32>
    %119 = vector.broadcast %118 : vector<1x32xf32> to vector<8x32xf32>
    %120 = arith.mulf %117, %119 : vector<8x32xf32>
    %121 = arith.truncf %120 : vector<8x32xf32> to vector<8x32xbf16>
    %c0_54 = arith.constant 0 : index
    %c0_55 = arith.constant 0 : index
    %c0_56 = arith.constant 0 : index
    %122 = vector.load %arg11[%c0_54, %c0_55, %c0_56] : memref<1x8x32xbf16, #tpu.memory_space<vmem>>, vector<1x8x32xbf16>
    %123 = vector.shape_cast %122 : vector<1x8x32xbf16> to vector<8x32xbf16>
    %124 = vector.shape_cast %121 : vector<8x32xbf16> to vector<1x8x32xbf16>
    tpu.vector_store %arg11[%c0_54, %c0_55, %c0_56], %124 {strides = array<i32>} : memref<1x8x32xbf16, #tpu.memory_space<vmem>>, vector<1x8x32xbf16>,
    return
  }
  func.func @transform_0(%arg0: i32) -> (i32, i32, i32) {
    %c0_i32 = arith.constant 0 : i32
    %c0_i32_0 = arith.constant 0 : i32
    %c0_i32_1 = arith.constant 0 : i32
    return %arg0, %c0_i32, %c0_i32_0 : i32, i32, i32
  }
  func.func @transform_1(%arg0: i32) -> (i32, i32) {
    %c0_i32 = arith.constant 0 : i32
    %c0_i32_0 = arith.constant 0 : i32
    %c0_i32_1 = arith.constant 0 : i32
    return %c0_i32, %c0_i32_0 : i32, i32
  }
  func.func @transform_2(%arg0: i32) -> (i32, i32) {
    %c0_i32 = arith.constant 0 : i32
    %c0_i32_0 = arith.constant 0 : i32
    %c0_i32_1 = arith.constant 0 : i32
    return %c0_i32, %c0_i32_0 : i32, i32
  }
  func.func @transform_3(%arg0: i32) -> (i32, i32) {
    %c0_i32 = arith.constant 0 : i32
    %c0_i32_0 = arith.constant 0 : i32
    %c0_i32_1 = arith.constant 0 : i32
    return %c0_i32, %c0_i32_0 : i32, i32
  }
  func.func @transform_4(%arg0: i32) -> (i32, i32) {
    %c0_i32 = arith.constant 0 : i32
    %c0_i32_0 = arith.constant 0 : i32
    %c0_i32_1 = arith.constant 0 : i32
    return %c0_i32, %c0_i32_0 : i32, i32
  }
  func.func @transform_5(%arg0: i32) -> (i32, i32) {
    %c0_i32 = arith.constant 0 : i32
    %c0_i32_0 = arith.constant 0 : i32
    %c0_i32_1 = arith.constant 0 : i32
    return %c0_i32, %c0_i32_0 : i32, i32
  }
  func.func @transform_6(%arg0: i32) -> (i32, i32) {
    %c0_i32 = arith.constant 0 : i32
    %c0_i32_0 = arith.constant 0 : i32
    %c0_i32_1 = arith.constant 0 : i32
    return %c0_i32, %c0_i32_0 : i32, i32
  }
  func.func @transform_7(%arg0: i32) -> (i32, i32) {
    %c0_i32 = arith.constant 0 : i32
    %c0_i32_0 = arith.constant 0 : i32
    %c0_i32_1 = arith.constant 0 : i32
    return %c0_i32, %c0_i32_0 : i32, i32
  }
  func.func @transform_8(%arg0: i32) -> (i32, i32) {
    %c0_i32 = arith.constant 0 : i32
    %c0_i32_0 = arith.constant 0 : i32
    %c0_i32_1 = arith.constant 0 : i32
    return %c0_i32, %c0_i32_0 : i32, i32
  }
  func.func @transform_9(%arg0: i32) -> (i32, i32, i32) {
    %c0_i32 = arith.constant 0 : i32
    %c0_i32_0 = arith.constant 0 : i32
    %c0_i32_1 = arith.constant 0 : i32
    return %arg0, %c0_i32, %c0_i32_0 : i32, i32, i32
  }
  func.func @transform_10(%arg0: i32) -> (i32, i32, i32) {
    %c0_i32 = arith.constant 0 : i32
    %c0_i32_0 = arith.constant 0 : i32
    %c0_i32_1 = arith.constant 0 : i32
    return %arg0, %c0_i32, %c0_i32_0 : i32, i32, i32
  }
}

</mosaic_0001>

<llo_original>
// kernel: tpu_custom_call.1
$region0: #{tpu_custom_call.1}
  #allocation0 [shape = 'u32[]', space=smem, size = 0x4, offset = 0x4, fixed_abs, tag = 'smem constant byte address 0x4 - core index']
  #allocation1 [shape = 'u32[144,128]{1,0:T(1,128)}', space=vmem, size = 0x12000, scoped, tag = 'internal scratch']
  #allocation2 [shape = 'bf16[8,32]{1,0:T(8,128)(2,1)}', space=vmem, size = 0x800, scoped, tag = 'scratch operand']
  %s0 = inlined_call_operand.vmem [shape: f32[2,8,32], index: 0, kind: input, shape index: {}]
  %s1 = inlined_call_operand.vmem [shape: f32[1,32], index: 1, kind: input, shape index: {}]
  %s2 = inlined_call_operand.hbm [shape: f32[1,32], index: 2, kind: input, shape index: {}]
  %s3 = inlined_call_operand.vmem [shape: bf16[32,32], index: 3, kind: input, shape index: {}]
  %s4 = inlined_call_operand.vmem [shape: bf16[32,16], index: 4, kind: input, shape index: {}]
  %s5 = inlined_call_operand.hbm [shape: bf16[16,32], index: 5, kind: input, shape index: {}]
  %s6 = inlined_call_operand.vmem [shape: bf16[32,16], index: 6, kind: input, shape index: {}]
  %s7 = inlined_call_operand.hbm [shape: bf16[16,32], index: 7, kind: input, shape index: {}]
  %s8 = inlined_call_operand.vmem [shape: bf16[32,32], index: 8, kind: input, shape index: {}]
  %s9 = inlined_call_operand.hbm [shape: f32[2,8,32], index: 9, kind: output, shape index: {0}]
  %s10 = inlined_call_operand.hbm [shape: bf16[2,8,32], index: 10, kind: output, shape index: {1}]
  %11 = xla_tuple %s9, %s10
  %s12 = sld [smem:[#allocation0]]
  $region89: #{tpu_custom_call.1} parent=0
    _
  %s14 = ssub.s32 1, %s12
  %s15 = scalar_select 0, %s14, %s12
  $region1: #{tpu_custom_call.1} parent=0
    #allocation3 [shape = 'u8[512]{0}', space=vmem, size = 0x400, scoped, tag = 'input window, operand 2, single buffered']
    #allocation4 [shape = 's32[2]{0}', space=sflag, size = 0x8, scoped, tag = 'scoped memory for tpu_custom_call.1']
    #allocation5 [shape = 's32[2]{0}', space=sflag, size = 0x8, scoped, tag = 'scoped memory for tpu_custom_call.1']
    #allocation6 [shape = 'u8[4096]{0}', space=vmem, size = 0x1000, scoped, tag = 'input window, operand 5, single buffered']
    #allocation7 [shape = 's32[1]{0}', space=sflag, size = 0x4, scoped, tag = 'scoped memory for tpu_custom_call.1']
    #allocation8 [shape = 'u8[4096]{0}', space=vmem, size = 0x1000, scoped, tag = 'input window, operand 7, single buffered']
    #allocation9 [shape = 'u8[8192]{0}', space=vmem, size = 0x2000, scoped, tag = 'output window, operand 0']
    #allocation10 [shape = 'u8[4096]{0}', space=vmem, size = 0x1000, scoped, tag = 'output window, operand 1']
    #allocation11 [shape = 's32[2]{0}', space=sflag, size = 0x8, scoped, tag = 'scoped memory for tpu_custom_call.1']
    %16 = vsyncpa [#allocation4], 0
    %17 = vsyncpa [#allocation7], 0
    %18 = vsyncpa [#allocation5], 0
    %s19 = scalar_lea.sflag [#allocation5], 1
    %20 = vsyncpa %s19, 0
    %21 = vsyncpa [#allocation11], 0
    %s22 = scalar_lea.sflag [#allocation11], 1
    %23 = vsyncpa %s22, 0
    loop: start=0, step=1, limit=4
    $region2: #{tpu_custom_call.1} parent=1 // loop_pre_header
      _
    $region3: #{tpu_custom_call.1} parent=1 // loop_header
      %s25 = sphi 0, %s29
      %p26 = scmp.ge.s32.totalorder %s25, 4
      %s35 = sphi 0, %s37
      %s38 = sphi 0, %s35
      %s39 = sphi 0, %s38
      %s55 = sphi 0, %s39
      %s59 = sphi 0, %s59
      %s61 = sphi 0, %s59
      %s62 = sphi 0, %s61
      %s76 = sphi 0, %s62
      %s80 = sphi 0, %s80
      %s82 = sphi 0, %s80
      %s83 = sphi 0, %s82
      %s97 = sphi 0, %s83
      %s101 = sphi 0, %s101
      %s103 = sphi 0, %s101
      %s104 = sphi 0, %s103
      %s118 = sphi 0, %s104
      %s122 = sphi 0, %s122
      %s124 = sphi 0, %s122
      %s125 = sphi 0, %s124
      %s139 = sphi 0, %s125
      %s143 = sphi 0, %s143
      %s145 = sphi 0, %s143
      %s146 = sphi 0, %s145
      %s160 = sphi 0, %s146
      %s164 = sphi 0, %s164
      %s166 = sphi 0, %s164
      %s167 = sphi 0, %s166
      %s181 = sphi 0, %s167
      %s185 = sphi 0, %s185
      %s187 = sphi 0, %s185
      %s188 = sphi 0, %s187
      %s202 = sphi 0, %s188
      %s206 = sphi 0, %s206
      %s208 = sphi 0, %s206
      %s209 = sphi 0, %s208
      %s223 = sphi 0, %s209
      %s229 = sphi 0, %s231
      %s232 = sphi 0, %s229
      %s233 = sphi 0, %s232
      %s249 = sphi 0, %s233
      %s255 = sphi 0, %s257
      %s258 = sphi 0, %s255
      %s259 = sphi 0, %s258
      %s275 = sphi 0, %s259
    $region4: #{tpu_custom_call.1} parent=1 // loop_header_branch
      %28 = sbr.rel (%p26) target = $region8
    $region5: #{tpu_custom_call.1} parent=1 // loop_body
      %s30 = ssub.s32 %s25, 1
      %s31 = ssub.s32 %s25, 2
      %s32 = sadd.s32 %s25, 1
      %s33 = ssub.s32 %s25, %s32
      %p34 = scmp.eq.s32.totalorder %s33, 0
      %s36 = sadd.s32 %s35, 1
      %s37 = scalar_select %p34, %s35, %s36
      %p40 = pneg %p34
      %p41 = scmp.eq.s32.totalorder %s25, 1
      %p42 = por %p40, %p41
      %p43 = scmp.ne.s32.totalorder %s35, %s38
      %p44 = scmp.eq.s32.totalorder %s25, 0
      %p45 = por %p43, %p44
      %p46 = scmp.ne.s32.totalorder %s35, %s38
      %p47 = scmp.eq.s32.totalorder %s30, 1
      %p48 = por %p46, %p47
      %p49 = scmp.ne.s32.totalorder %s38, %s39
      %p50 = scmp.eq.s32.totalorder %s30, 0
      %p51 = por %p49, %p50
      %p52 = scmp.ne.s32.totalorder %s38, %s39
      %p53 = scmp.eq.s32.totalorder %s31, 1
      %p54 = por %p52, %p53
      %p56 = scmp.ne.s32.totalorder %s39, %s55
      %p57 = scmp.eq.s32.totalorder %s31, 0
      %p58 = por %p56, %p57
      %s60 = sadd.s32 %s59, 1
      %p63 = scmp.eq.s32.totalorder %s25, 1
      %p64 = scmp.ne.s32.totalorder %s59, %s61
      %p65 = scmp.eq.s32.totalorder %s25, 0
      %p66 = por %p64, %p65
      %p67 = scmp.ne.s32.totalorder %s59, %s61
      %p68 = scmp.eq.s32.totalorder %s30, 1
      %p69 = por %p67, %p68
      %p70 = scmp.ne.s32.totalorder %s61, %s62
      %p71 = scmp.eq.s32.totalorder %s30, 0
      %p72 = por %p70, %p71
      %p73 = scmp.ne.s32.totalorder %s61, %s62
      %p74 = scmp.eq.s32.totalorder %s31, 1
      %p75 = por %p73, %p74
      %p77 = scmp.ne.s32.totalorder %s62, %s76
      %p78 = scmp.eq.s32.totalorder %s31, 0
      %p79 = por %p77, %p78
      %s81 = sadd.s32 %s80, 1
      %p84 = scmp.eq.s32.totalorder %s25, 1
      %p85 = scmp.ne.s32.totalorder %s80, %s82
      %p86 = scmp.eq.s32.totalorder %s25, 0
      %p87 = por %p85, %p86
      %p88 = scmp.ne.s32.totalorder %s80, %s82
      %p89 = scmp.eq.s32.totalorder %s30, 1
      %p90 = por %p88, %p89
      %p91 = scmp.ne.s32.totalorder %s82, %s83
      %p92 = scmp.eq.s32.totalorder %s30, 0
      %p93 = por %p91, %p92
      %p94 = scmp.ne.s32.totalorder %s82, %s83
      %p95 = scmp.eq.s32.totalorder %s31, 1
      %p96 = por %p94, %p95
      %p98 = scmp.ne.s32.totalorder %s83, %s97
      %p99 = scmp.eq.s32.totalorder %s31, 0
      %p100 = por %p98, %p99
      %s102 = sadd.s32 %s101, 1
      %p105 = scmp.eq.s32.totalorder %s25, 1
      %p106 = scmp.ne.s32.totalorder %s101, %s103
      %p107 = scmp.eq.s32.totalorder %s25, 0
      %p108 = por %p106, %p107
      %p109 = scmp.ne.s32.totalorder %s101, %s103
      %p110 = scmp.eq.s32.totalorder %s30, 1
      %p111 = por %p109, %p110
      %p112 = scmp.ne.s32.totalorder %s103, %s104
      %p113 = scmp.eq.s32.totalorder %s30, 0
      %p114 = por %p112, %p113
      %p115 = scmp.ne.s32.totalorder %s103, %s104
      %p116 = scmp.eq.s32.totalorder %s31, 1
      %p117 = por %p115, %p116
      %p119 = scmp.ne.s32.totalorder %s104, %s118
      %p120 = scmp.eq.s32.totalorder %s31, 0
      %p121 = por %p119, %p120
      %s123 = sadd.s32 %s122, 1
      %p126 = scmp.eq.s32.totalorder %s25, 1
      %p127 = scmp.ne.s32.totalorder %s122, %s124
      %p128 = scmp.eq.s32.totalorder %s25, 0
      %p129 = por %p127, %p128
      %p130 = scmp.ne.s32.totalorder %s122, %s124
      %p131 = scmp.eq.s32.totalorder %s30, 1
      %p132 = por %p130, %p131
      %p133 = scmp.ne.s32.totalorder %s124, %s125
      %p134 = scmp.eq.s32.totalorder %s30, 0
      %p135 = por %p133, %p134
      %p136 = scmp.ne.s32.totalorder %s124, %s125
      %p137 = scmp.eq.s32.totalorder %s31, 1
      %p138 = por %p136, %p137
      %p140 = scmp.ne.s32.totalorder %s125, %s139
      %p141 = scmp.eq.s32.totalorder %s31, 0
      %p142 = por %p140, %p141
      %s144 = sadd.s32 %s143, 1
      %p147 = scmp.eq.s32.totalorder %s25, 1
      %p148 = scmp.ne.s32.totalorder %s143, %s145
      %p149 = scmp.eq.s32.totalorder %s25, 0
      %p150 = por %p148, %p149
      %p151 = scmp.ne.s32.totalorder %s143, %s145
      %p152 = scmp.eq.s32.totalorder %s30, 1
      %p153 = por %p151, %p152
      %p154 = scmp.ne.s32.totalorder %s145, %s146
      %p155 = scmp.eq.s32.totalorder %s30, 0
      %p156 = por %p154, %p155
      %p157 = scmp.ne.s32.totalorder %s145, %s146
      %p158 = scmp.eq.s32.totalorder %s31, 1
      %p159 = por %p157, %p158
      %p161 = scmp.ne.s32.totalorder %s146, %s160
      %p162 = scmp.eq.s32.totalorder %s31, 0
      %p163 = por %p161, %p162
      %s165 = sadd.s32 %s164, 1
      %p168 = scmp.eq.s32.totalorder %s25, 1
      %p169 = scmp.ne.s32.totalorder %s164, %s166
      %p170 = scmp.eq.s32.totalorder %s25, 0
      %p171 = por %p169, %p170
      %p172 = scmp.ne.s32.totalorder %s164, %s166
      %p173 = scmp.eq.s32.totalorder %s30, 1
      %p174 = por %p172, %p173
      %p175 = scmp.ne.s32.totalorder %s166, %s167
      %p176 = scmp.eq.s32.totalorder %s30, 0
      %p177 = por %p175, %p176
      %p178 = scmp.ne.s32.totalorder %s166, %s167
      %p179 = scmp.eq.s32.totalorder %s31, 1
      %p180 = por %p178, %p179
      %p182 = scmp.ne.s32.totalorder %s167, %s181
      %p183 = scmp.eq.s32.totalorder %s31, 0
      %p184 = por %p182, %p183
      %s186 = sadd.s32 %s185, 1
      %p189 = scmp.eq.s32.totalorder %s25, 1
      %p190 = scmp.ne.s32.totalorder %s185, %s187
      %p191 = scmp.eq.s32.totalorder %s25, 0
      %p192 = por %p190, %p191
      %p193 = scmp.ne.s32.totalorder %s185, %s187
      %p194 = scmp.eq.s32.totalorder %s30, 1
      %p195 = por %p193, %p194
      %p196 = scmp.ne.s32.totalorder %s187, %s188
      %p197 = scmp.eq.s32.totalorder %s30, 0
      %p198 = por %p196, %p197
      %p199 = scmp.ne.s32.totalorder %s187, %s188
      %p200 = scmp.eq.s32.totalorder %s31, 1
      %p201 = por %p199, %p200
      %p203 = scmp.ne.s32.totalorder %s188, %s202
      %p204 = scmp.eq.s32.totalorder %s31, 0
      %p205 = por %p203, %p204
      %s207 = sadd.s32 %s206, 1
      %p210 = scmp.eq.s32.totalorder %s25, 1
      %p211 = scmp.ne.s32.totalorder %s206, %s208
      %p212 = scmp.eq.s32.totalorder %s25, 0
      %p213 = por %p211, %p212
      %p214 = scmp.ne.s32.totalorder %s206, %s208
      %p215 = scmp.eq.s32.totalorder %s30, 1
      %p216 = por %p214, %p215
      %p217 = scmp.ne.s32.totalorder %s208, %s209
      %p218 = scmp.eq.s32.totalorder %s30, 0
      %p219 = por %p217, %p218
      %p220 = scmp.ne.s32.totalorder %s208, %s209
      %p221 = scmp.eq.s32.totalorder %s31, 1
      %p222 = por %p220, %p221
      %p224 = scmp.ne.s32.totalorder %s209, %s223
      %p225 = scmp.eq.s32.totalorder %s31, 0
      %p226 = por %p224, %p225
      %s227 = ssub.s32 %s25, %s32
      %p228 = scmp.eq.s32.totalorder %s227, 0
      %s230 = sadd.s32 %s229, 1
      %s231 = scalar_select %p228, %s229, %s230
      %p234 = pneg %p228
      %p235 = scmp.eq.s32.totalorder %s25, 1
      %p236 = por %p234, %p235
      %p237 = scmp.ne.s32.totalorder %s229, %s232
      %p238 = scmp.eq.s32.totalorder %s25, 0
      %p239 = por %p237, %p238
      %p240 = scmp.ne.s32.totalorder %s229, %s232
      %p241 = scmp.eq.s32.totalorder %s30, 1
      %p242 = por %p240, %p241
      %p243 = scmp.ne.s32.totalorder %s232, %s233
      %p244 = scmp.eq.s32.totalorder %s30, 0
      %p245 = por %p243, %p244
      %p246 = scmp.ne.s32.totalorder %s232, %s233
      %p247 = scmp.eq.s32.totalorder %s31, 1
      %p248 = por %p246, %p247
      %p250 = scmp.ne.s32.totalorder %s233, %s249
      %p251 = scmp.eq.s32.totalorder %s31, 0
      %p252 = por %p250, %p251
      %s253 = ssub.s32 %s25, %s32
      %p254 = scmp.eq.s32.totalorder %s253, 0
      %s256 = sadd.s32 %s255, 1
      %s257 = scalar_select %p254, %s255, %s256
      %p260 = pneg %p254
      %p261 = scmp.eq.s32.totalorder %s25, 1
      %p262 = por %p260, %p261
      %p263 = scmp.ne.s32.totalorder %s255, %s258
      %p264 = scmp.eq.s32.totalorder %s25, 0
      %p265 = por %p263, %p264
      %p266 = scmp.ne.s32.totalorder %s255, %s258
      %p267 = scmp.eq.s32.totalorder %s30, 1
      %p268 = por %p266, %p267
      %p269 = scmp.ne.s32.totalorder %s258, %s259
      %p270 = scmp.eq.s32.totalorder %s30, 0
      %p271 = por %p269, %p270
      %p272 = scmp.ne.s32.totalorder %s258, %s259
      %p273 = scmp.eq.s32.totalorder %s31, 1
      %p274 = por %p272, %p273
      %p276 = scmp.ne.s32.totalorder %s259, %s275
      %p277 = scmp.eq.s32.totalorder %s31, 0
      %p278 = por %p276, %p277
      %p279 = scmp.le.s32.totalorder 1, %s25
      %p280 = scmp.lt.s32.totalorder %s25, 3
      %p281 = pnand %p279, %p280
      %p282 = pneg %p281
      // Predicated region
      $region9: #{tpu_custom_call.1} parent=5 // pred_check
        _
      $region10: #{tpu_custom_call.1} parent=5 // pred_check_branch
        %284 = sbr.rel (%p281) target = $region12
      $region11: #{tpu_custom_call.1} parent=5 // pred_region
        %s285 = ssub.s32 %s25, 1
        // Predicated region
        $region13: #{tpu_custom_call.1} parent=11 // pred_check
          %p286 = pneg %p72
        $region14: #{tpu_custom_call.1} parent=11 // pred_check_branch
          %288 = sbr.rel (%p286) target = $region16
        $region15: #{tpu_custom_call.1} parent=11 // pred_region
          _
        $region16: #{tpu_custom_call.1} parent=11 // pred_fallthru
          _
        // Predicated region
        $region17: #{tpu_custom_call.1} parent=11 // pred_check
          %p289 = pneg %p93
        $region18: #{tpu_custom_call.1} parent=11 // pred_check_branch
          %291 = sbr.rel (%p289) target = $region20
        $region19: #{tpu_custom_call.1} parent=11 // pred_region
          %s293 = ssub.s32 16, 16
          %294 = vsyncadd [#allocation4], %s293
          %s296 = sshll.u32 [#allocation3], 4
          %s297 = int_to_ptr.vmem [resolvable:$true] %s296
          %299 = dma.hbm_to_vmem [thread:$0]  %s2, 16, %s297, [#allocation4]
        $region20: #{tpu_custom_call.1} parent=11 // pred_fallthru
          _
        // Predicated region
        $region21: #{tpu_custom_call.1} parent=11 // pred_check
          %p300 = pneg %p114
        $region22: #{tpu_custom_call.1} parent=11 // pred_check_branch
          %302 = sbr.rel (%p300) target = $region24
        $region23: #{tpu_custom_call.1} parent=11 // pred_region
          _
        $region24: #{tpu_custom_call.1} parent=11 // pred_fallthru
          _
        // Predicated region
        $region25: #{tpu_custom_call.1} parent=11 // pred_check
          %p303 = pneg %p135
        $region26: #{tpu_custom_call.1} parent=11 // pred_check_branch
          %305 = sbr.rel (%p303) target = $region28
        $region27: #{tpu_custom_call.1} parent=11 // pred_region
          _
        $region28: #{tpu_custom_call.1} parent=11 // pred_fallthru
          _
        // Predicated region
        $region29: #{tpu_custom_call.1} parent=11 // pred_check
          %p306 = pneg %p156
        $region30: #{tpu_custom_call.1} parent=11 // pred_check_branch
          %308 = sbr.rel (%p306) target = $region32
        $region31: #{tpu_custom_call.1} parent=11 // pred_region
          %s310 = ssub.s32 128, 128
          %311 = vsyncadd [#allocation7], %s310
          %s312 = sshll.u32 [#allocation6], 4
          %s313 = int_to_ptr.vmem [resolvable:$true] %s312
          %318 = dma.hbm_to_vmem [thread:$0]  %s5, 128, %s313, [#allocation7], 64, 64, 4
        $region32: #{tpu_custom_call.1} parent=11 // pred_fallthru
          _
        // Predicated region
        $region33: #{tpu_custom_call.1} parent=11 // pred_check
          %p319 = pneg %p177
        $region34: #{tpu_custom_call.1} parent=11 // pred_check_branch
          %321 = sbr.rel (%p319) target = $region36
        $region35: #{tpu_custom_call.1} parent=11 // pred_region
          _
        $region36: #{tpu_custom_call.1} parent=11 // pred_fallthru
          _
        // Predicated region
        $region37: #{tpu_custom_call.1} parent=11 // pred_check
          %p322 = pneg %p198
        $region38: #{tpu_custom_call.1} parent=11 // pred_check_branch
          %324 = sbr.rel (%p322) target = $region40
        $region39: #{tpu_custom_call.1} parent=11 // pred_region
          %s326 = ssub.s32 128, 128
          %327 = vsyncadd [#allocation7], %s326
          %s328 = sshll.u32 [#allocation8], 4
          %s329 = int_to_ptr.vmem [resolvable:$true] %s328
          %334 = dma.hbm_to_vmem [thread:$0]  %s7, 128, %s329, [#allocation7], 64, 64, 4
        $region40: #{tpu_custom_call.1} parent=11 // pred_fallthru
          _
        // Predicated region
        $region41: #{tpu_custom_call.1} parent=11 // pred_check
          %p335 = pneg %p219
        $region42: #{tpu_custom_call.1} parent=11 // pred_check_branch
          %337 = sbr.rel (%p335) target = $region44
        $region43: #{tpu_custom_call.1} parent=11 // pred_region
          _
        $region44: #{tpu_custom_call.1} parent=11 // pred_fallthru
          _
      $region12: #{tpu_custom_call.1} parent=5 // pred_fallthru
        _
      %p338 = scmp.lt.s32.totalorder %s25, 2
      // Predicated region
      $region45: #{tpu_custom_call.1} parent=5 // pred_check
        %p339 = pneg %p338
      $region46: #{tpu_custom_call.1} parent=5 // pred_check_branch
        %341 = sbr.rel (%p339) target = $region48
      $region47: #{tpu_custom_call.1} parent=5 // pred_region
        // Predicated region
        $region49: #{tpu_custom_call.1} parent=47 // pred_check
          %p342 = pneg %p45
        $region50: #{tpu_custom_call.1} parent=47 // pred_check_branch
          %344 = sbr.rel (%p342) target = $region52
        $region51: #{tpu_custom_call.1} parent=47 // pred_region
          %p345 = scmp.lt.s32.totalorder %s25, 1
          %s346 = scalar_select %p345, %s25, 1
          %s347 = smul.addr %s346, 8
          %s348 = scalar_lea.vmem %s0, %s347
        $region52: #{tpu_custom_call.1} parent=47 // pred_fallthru
          _
      $region48: #{tpu_custom_call.1} parent=5 // pred_fallthru
        _
      %p349 = scmp.le.s32.totalorder 1, %s25
      %p350 = scmp.lt.s32.totalorder %s25, 3
      %p351 = pnand %p349, %p350
      %p352 = pneg %p351
      // Predicated region
      $region53: #{tpu_custom_call.1} parent=5 // pred_check
        _
      $region54: #{tpu_custom_call.1} parent=5 // pred_check_branch
        %354 = sbr.rel (%p351) target = $region56
      $region55: #{tpu_custom_call.1} parent=5 // pred_region
        %s355 = ssub.s32 %s25, 1
        // Predicated region
        $region57: #{tpu_custom_call.1} parent=55 // pred_check
          %p356 = pneg %p93
        $region58: #{tpu_custom_call.1} parent=55 // pred_check_branch
          %358 = sbr.rel (%p356) target = $region60
        $region59: #{tpu_custom_call.1} parent=55 // pred_region
          %359 = dma.done [#allocation4], 16
        $region60: #{tpu_custom_call.1} parent=55 // pred_fallthru
          _
        // Predicated region
        $region61: #{tpu_custom_call.1} parent=55 // pred_check
          %p360 = pneg %p156
        $region62: #{tpu_custom_call.1} parent=55 // pred_check_branch
          %362 = sbr.rel (%p360) target = $region64
        $region63: #{tpu_custom_call.1} parent=55 // pred_region
          %363 = dma.done [#allocation7], 128
        $region64: #{tpu_custom_call.1} parent=55 // pred_fallthru
          _
        // Predicated region
        $region65: #{tpu_custom_call.1} parent=55 // pred_check
          %p364 = pneg %p198
        $region66: #{tpu_custom_call.1} parent=55 // pred_check_branch
          %366 = sbr.rel (%p364) target = $region68
        $region67: #{tpu_custom_call.1} parent=55 // pred_region
          %367 = dma.done [#allocation7], 128
        $region68: #{tpu_custom_call.1} parent=55 // pred_fallthru
          _
        %p368 = scmp.lt.s32.totalorder %s30, 1
        %s369 = scalar_select %p368, %s30, 1
        %s370 = smul.addr %s369, 8
        %s371 = scalar_lea.vmem %s0, %s370
        %p372 = pneg %p51
        %p373 = pneg %p48
        %p374 = pneg %p72
        %p375 = pneg %p69
        %p376 = pneg %p93
        %p377 = pneg %p90
        %p378 = pneg %p114
        %p379 = pneg %p111
        %p380 = pneg %p135
        %p381 = pneg %p132
        %p382 = pneg %p156
        %p383 = pneg %p153
        %p384 = pneg %p177
        %p385 = pneg %p174
        %p386 = pneg %p198
        %p387 = pneg %p195
        %p388 = pneg %p219
        %p389 = pneg %p216
        %p390 = pneg %p245
        %p391 = pneg %p242
        %s392 = sand.u32 %s232, 1
        %s393 = scalar_lea.sflag [#allocation5], %s392
        %s394 = sand.u32 %s232, 1
        %s395 = smul.addr %s394, 8
        %s396 = scalar_lea.vmem [#allocation9], %s395
        %p397 = pneg %p271
        %p398 = pneg %p268
        %s399 = sand.u32 %s258, 1
        %s400 = scalar_lea.sflag [#allocation11], %s399
        %s401 = sand.u32 %s258, 1
        %s402 = smul.addr %s401, 4
        %s403 = scalar_lea.vmem [#allocation10], %s402
        %p404 = scmp.lt.s32.totalorder %s30, 1
        %s405 = scalar_select %p404, %s30, 1
        %s406 = smul.addr %s405, 8
        %s407 = scalar_lea.vmem %s0, %s406
        %v409 = vld [vmem:[%s407] sm:$0xff]
        %v410 = vmul.f32 %v409, %v409
        %vm411 = vcmask 261120
        %v412 = vsel %vm411, %v410, 0.0
        %413 = vadd.xlane.f32.xlu0 %v412
        %v414 = vpop.xlane.xlu0 %413
        %v415 = vrcp.pop 32.0
        %v416 = vmul.f32 %v414, %v415
        %v417 = vrsqrt.pop %v416
        %v418 = vmul.f32 %v409, %v417
        %v419 = vld [vmem:[%s1] sm:$0x1]
        %v421 = vlaneseq
        %v422 = vshrl.u32 %v421, 7
        %v423 = vsub.s32 0, %v422
        %v424 = vrot.slane %v419, %v423
        %v426 = vmul.f32 %v418, %v424
        %v427 = vpack.c.bf16 %v426, %v426
        %v428 = vld [vmem:[%s3] sm:$0xf]
        %v429 = vld [vmem:[%s3 + $0x4] sm:$0xf]
        %v430 = vld [vmem:[%s3 + $0x8] sm:$0xf]
        %v431 = vld [vmem:[%s3 + $0xc] sm:$0xf]
        %v436 = vunpack.c.l.b16 %v428
        %v437 = vunpack.c.l.b16 %v429
        %v438 = vunpack.c.l.b16 %v430
        %v439 = vunpack.c.l.b16 %v431
        %v440 = vpack.c.b16 %v437, %v436
        %v441 = vpack.c.b16 %v439, %v438
        %v445 = vsel %vm411, %v427, 0
        %447 = vmatprep.subr.bf16.mxu0 0
        %448 = vmatpush1.bf16.msra.mxu0 0
        %449 = vmatprep.subr.bf16.mxu0 0
        %450 = vmatpush1.bf16.msra.mxu0 0
        %451 = vmatprep.subr.bf16.mxu0 0
        %452 = vmatpush1.bf16.msra.mxu0 0
        %453 = vmatprep.subr.bf16.mxu0 0
        %454 = vmatpush1.bf16.msra.mxu0 0
        %455 = vmatprep.subr.bf16.mxu0 0
        %456 = vmatpush1.bf16.msra.mxu0 0
        %457 = vmatprep.subr.bf16.mxu0 0
        %458 = vmatpush1.bf16.msra.mxu0 0
        %459 = vmatprep.subr.bf16.mxu0 0
        %460 = vmatpush1.bf16.msra.mxu0 %v441
        %461 = vmatprep.subr.bf16.mxu0 0
        %462 = vmatpush1.bf16.msra.mxu0 %v440
        %463 = vmatprep.subr.bf16.mxu0 0
        %464 = vmatpush2.bf16.msra.mxu0 0
        %465 = vmatprep.subr.bf16.mxu0 0
        %466 = vmatpush2.bf16.msra.mxu0 0
        %467 = vmatprep.subr.bf16.mxu0 0
        %468 = vmatpush2.bf16.msra.mxu0 0
        %469 = vmatprep.subr.bf16.mxu0 0
        %470 = vmatpush2.bf16.msra.mxu0 0
        %471 = vmatprep.subr.bf16.mxu0 0
        %472 = vmatpush2.bf16.msra.mxu0 0
        %473 = vmatprep.subr.bf16.mxu0 0
        %474 = vmatpush2.bf16.msra.mxu0 0
        %475 = vmatprep.subr.bf16.mxu0 0
        %476 = vmatpush2.bf16.msra.mxu0 0
        %477 = vmatprep.subr.bf16.mxu0 0
        %478 = vmatpush2.bf16.msra.mxu0 0
        %479 = vmatprep.mubr.bf16.mxu0 0
        %480 = vmatmul.mubr.bf16.gmra.mxu0 %v445
        %v481 = vpop.f32.mrf.mxu0
        %v482 = vadd.f32 0.0, %v481
        %v483 = vpop.f32.mrf.mxu0
        %v484 = vpop.f32.mrf.mxu0
        %v485 = vpop.f32.mrf.mxu0
        %486 = vdwg.mxu0
        %v487 = vld [vmem:[%s4] sm:$0xf]
        %v488 = vld [vmem:[%s4 + $0x4] sm:$0xf]
        %v489 = vld [vmem:[%s4 + $0x8] sm:$0xf]
        %v490 = vld [vmem:[%s4 + $0xc] sm:$0xf]
        %v495 = vunpack.c.l.b16 %v487
        %v496 = vunpack.c.l.b16 %v488
        %v497 = vunpack.c.l.b16 %v489
        %v498 = vunpack.c.l.b16 %v490
        %v499 = vpack.c.b16 %v496, %v495
        %v500 = vpack.c.b16 %v498, %v497
        %503 = vmatprep.subr.bf16.mxu0 0
        %504 = vmatpush1.bf16.msra.mxu0 0
        %505 = vmatprep.subr.bf16.mxu0 0
        %506 = vmatpush1.bf16.msra.mxu0 0
        %507 = vmatprep.subr.bf16.mxu0 0
        %508 = vmatpush1.bf16.msra.mxu0 0
        %509 = vmatprep.subr.bf16.mxu0 0
        %510 = vmatpush1.bf16.msra.mxu0 0
        %511 = vmatprep.subr.bf16.mxu0 0
        %512 = vmatpush1.bf16.msra.mxu0 0
        %513 = vmatprep.subr.bf16.mxu0 0
        %514 = vmatpush1.bf16.msra.mxu0 0
        %515 = vmatprep.subr.bf16.mxu0 0
        %516 = vmatpush1.bf16.msra.mxu0 %v500
        %517 = vmatprep.subr.bf16.mxu0 0
        %518 = vmatpush1.bf16.msra.mxu0 %v499
        %519 = vmatprep.subr.bf16.mxu0 0
        %520 = vmatpush2.bf16.msra.mxu0 0
        %521 = vmatprep.subr.bf16.mxu0 0
        %522 = vmatpush2.bf16.msra.mxu0 0
        %523 = vmatprep.subr.bf16.mxu0 0
        %524 = vmatpush2.bf16.msra.mxu0 0
        %525 = vmatprep.subr.bf16.mxu0 0
        %526 = vmatpush2.bf16.msra.mxu0 0
        %527 = vmatprep.subr.bf16.mxu0 0
        %528 = vmatpush2.bf16.msra.mxu0 0
        %529 = vmatprep.subr.bf16.mxu0 0
        %530 = vmatpush2.bf16.msra.mxu0 0
        %531 = vmatprep.subr.bf16.mxu0 0
        %532 = vmatpush2.bf16.msra.mxu0 0
        %533 = vmatprep.subr.bf16.mxu0 0
        %534 = vmatpush2.bf16.msra.mxu0 0
        %535 = vmatprep.mubr.bf16.mxu0 0
        %536 = vmatmul.mubr.bf16.gmra.mxu0 %v445
        %v537 = vpop.f32.mrf.mxu0
        %v538 = vadd.f32 0.0, %v537
        %v539 = vpop.f32.mrf.mxu0
        %v540 = vpop.f32.mrf.mxu0
        %v541 = vpop.f32.mrf.mxu0
        %542 = vdwg.mxu0
        %v543 = vpack.c.bf16 %v538, %v538
        %v544 = vld [vmem:[#allocation6] sm:$0xf]
        %v545 = vld [vmem:[#allocation6 + $0x4] sm:$0xf]
        %v548 = vunpack.c.l.b16 %v544
        %v549 = vunpack.c.l.b16 %v545
        %v550 = vpack.c.b16 %v549, %v548
        %vm552 = vcmask 130048
        %v554 = vsel %vm552, %v543, 0
        %556 = vmatprep.subr.bf16.mxu0 0
        %557 = vmatpush1.bf16.msra.mxu0 0
        %558 = vmatprep.subr.bf16.mxu0 0
        %559 = vmatpush1.bf16.msra.mxu0 0
        %560 = vmatprep.subr.bf16.mxu0 0
        %561 = vmatpush1.bf16.msra.mxu0 0
        %562 = vmatprep.subr.bf16.mxu0 0
        %563 = vmatpush1.bf16.msra.mxu0 0
        %564 = vmatprep.subr.bf16.mxu0 0
        %565 = vmatpush1.bf16.msra.mxu0 0
        %566 = vmatprep.subr.bf16.mxu0 0
        %567 = vmatpush1.bf16.msra.mxu0 0
        %568 = vmatprep.subr.bf16.mxu0 0
        %569 = vmatpush1.bf16.msra.mxu0 0
        %570 = vmatprep.subr.bf16.mxu0 0
        %571 = vmatpush1.bf16.msra.mxu0 %v550
        %572 = vmatprep.subr.bf16.mxu0 0
        %573 = vmatpush2.bf16.msra.mxu0 0
        %574 = vmatprep.subr.bf16.mxu0 0
        %575 = vmatpush2.bf16.msra.mxu0 0
        %576 = vmatprep.subr.bf16.mxu0 0
        %577 = vmatpush2.bf16.msra.mxu0 0
        %578 = vmatprep.subr.bf16.mxu0 0
        %579 = vmatpush2.bf16.msra.mxu0 0
        %580 = vmatprep.subr.bf16.mxu0 0
        %581 = vmatpush2.bf16.msra.mxu0 0
        %582 = vmatprep.subr.bf16.mxu0 0
        %583 = vmatpush2.bf16.msra.mxu0 0
        %584 = vmatprep.subr.bf16.mxu0 0
        %585 = vmatpush2.bf16.msra.mxu0 0
        %586 = vmatprep.subr.bf16.mxu0 0
        %587 = vmatpush2.bf16.msra.mxu0 0
        %588 = vmatprep.mubr.bf16.mxu0 0
        %589 = vmatmul.mubr.bf16.gmra.mxu0 %v554
        %v590 = vpop.f32.mrf.mxu0
        %v591 = vadd.f32 0.0, %v590
        %v592 = vpop.f32.mrf.mxu0
        %v593 = vpop.f32.mrf.mxu0
        %v594 = vpop.f32.mrf.mxu0
        %595 = vdwg.mxu0
        %v596 = vld [vmem:[%s6] sm:$0xf]
        %v597 = vld [vmem:[%s6 + $0x4] sm:$0xf]
        %v598 = vld [vmem:[%s6 + $0x8] sm:$0xf]
        %v599 = vld [vmem:[%s6 + $0xc] sm:$0xf]
        %v604 = vunpack.c.l.b16 %v596
        %v605 = vunpack.c.l.b16 %v597
        %v606 = vunpack.c.l.b16 %v598
        %v607 = vunpack.c.l.b16 %v599
        %v608 = vpack.c.b16 %v605, %v604
        %v609 = vpack.c.b16 %v607, %v606
        %612 = vmatprep.subr.bf16.mxu0 0
        %613 = vmatpush1.bf16.msra.mxu0 0
        %614 = vmatprep.subr.bf16.mxu0 0
        %615 = vmatpush1.bf16.msra.mxu0 0
        %616 = vmatprep.subr.bf16.mxu0 0
        %617 = vmatpush1.bf16.msra.mxu0 0
        %618 = vmatprep.subr.bf16.mxu0 0
        %619 = vmatpush1.bf16.msra.mxu0 0
        %620 = vmatprep.subr.bf16.mxu0 0
        %621 = vmatpush1.bf16.msra.mxu0 0
        %622 = vmatprep.subr.bf16.mxu0 0
        %623 = vmatpush1.bf16.msra.mxu0 0
        %624 = vmatprep.subr.bf16.mxu0 0
        %625 = vmatpush1.bf16.msra.mxu0 %v609
        %626 = vmatprep.subr.bf16.mxu0 0
        %627 = vmatpush1.bf16.msra.mxu0 %v608
        %628 = vmatprep.subr.bf16.mxu0 0
        %629 = vmatpush2.bf16.msra.mxu0 0
        %630 = vmatprep.subr.bf16.mxu0 0
        %631 = vmatpush2.bf16.msra.mxu0 0
        %632 = vmatprep.subr.bf16.mxu0 0
        %633 = vmatpush2.bf16.msra.mxu0 0
        %634 = vmatprep.subr.bf16.mxu0 0
        %635 = vmatpush2.bf16.msra.mxu0 0
        %636 = vmatprep.subr.bf16.mxu0 0
        %637 = vmatpush2.bf16.msra.mxu0 0
        %638 = vmatprep.subr.bf16.mxu0 0
        %639 = vmatpush2.bf16.msra.mxu0 0
        %640 = vmatprep.subr.bf16.mxu0 0
        %641 = vmatpush2.bf16.msra.mxu0 0
        %642 = vmatprep.subr.bf16.mxu0 0
        %643 = vmatpush2.bf16.msra.mxu0 0
        %644 = vmatprep.mubr.bf16.mxu0 0
        %645 = vmatmul.mubr.bf16.gmra.mxu0 %v445
        %v646 = vpop.f32.mrf.mxu0
        %v647 = vadd.f32 0.0, %v646
        %v648 = vpop.f32.mrf.mxu0
        %v649 = vpop.f32.mrf.mxu0
        %v650 = vpop.f32.mrf.mxu0
        %651 = vdwg.mxu0
        %v652 = vpack.c.bf16 %v647, %v647
        %v653 = vld [vmem:[#allocation8] sm:$0xf]
        %v654 = vld [vmem:[#allocation8 + $0x4] sm:$0xf]
        %v657 = vunpack.c.l.b16 %v653
        %v658 = vunpack.c.l.b16 %v654
        %v659 = vpack.c.b16 %v658, %v657
        %v662 = vsel %vm552, %v652, 0
        %664 = vmatprep.subr.bf16.mxu0 0
        %665 = vmatpush1.bf16.msra.mxu0 0
        %666 = vmatprep.subr.bf16.mxu0 0
        %667 = vmatpush1.bf16.msra.mxu0 0
        %668 = vmatprep.subr.bf16.mxu0 0
        %669 = vmatpush1.bf16.msra.mxu0 0
        %670 = vmatprep.subr.bf16.mxu0 0
        %671 = vmatpush1.bf16.msra.mxu0 0
        %672 = vmatprep.subr.bf16.mxu0 0
        %673 = vmatpush1.bf16.msra.mxu0 0
        %674 = vmatprep.subr.bf16.mxu0 0
        %675 = vmatpush1.bf16.msra.mxu0 0
        %676 = vmatprep.subr.bf16.mxu0 0
        %677 = vmatpush1.bf16.msra.mxu0 0
        %678 = vmatprep.subr.bf16.mxu0 0
        %679 = vmatpush1.bf16.msra.mxu0 %v659
        %680 = vmatprep.subr.bf16.mxu0 0
        %681 = vmatpush2.bf16.msra.mxu0 0
        %682 = vmatprep.subr.bf16.mxu0 0
        %683 = vmatpush2.bf16.msra.mxu0 0
        %684 = vmatprep.subr.bf16.mxu0 0
        %685 = vmatpush2.bf16.msra.mxu0 0
        %686 = vmatprep.subr.bf16.mxu0 0
        %687 = vmatpush2.bf16.msra.mxu0 0
        %688 = vmatprep.subr.bf16.mxu0 0
        %689 = vmatpush2.bf16.msra.mxu0 0
        %690 = vmatprep.subr.bf16.mxu0 0
        %691 = vmatpush2.bf16.msra.mxu0 0
        %692 = vmatprep.subr.bf16.mxu0 0
        %693 = vmatpush2.bf16.msra.mxu0 0
        %694 = vmatprep.subr.bf16.mxu0 0
        %695 = vmatpush2.bf16.msra.mxu0 0
        %696 = vmatprep.mubr.bf16.mxu0 0
        %697 = vmatmul.mubr.bf16.gmra.mxu0 %v662
        %v698 = vpop.f32.mrf.mxu0
        %v699 = vadd.f32 0.0, %v698
        %v700 = vpop.f32.mrf.mxu0
        %v701 = vpop.f32.mrf.mxu0
        %v702 = vpop.f32.mrf.mxu0
        %703 = vdwg.mxu0
        %v704 = vmul.f32 %v482, 0.35355338
        %v705 = vpack.c.bf16 %v704, %v704
        %v706 = vpack.c.bf16 %v591, %v591
        %v707 = vpack.c.bf16 %v699, %v699
        %vm708 = vcmask 64512
        %v710 = vsel %vm708, %v705, 0
        %v713 = vsel %vm708, %v706, 0
        %715 = vmatprep.subr.bf16.mxu0 0
        %716 = vmatpush1.bf16.xpose.msra.mxu0 0
        %717 = vmatprep.subr.bf16.mxu0 0
        %718 = vmatpush1.bf16.xpose.msra.mxu0 0
        %719 = vmatprep.subr.bf16.mxu0 0
        %720 = vmatpush1.bf16.xpose.msra.mxu0 0
        %721 = vmatprep.subr.bf16.mxu0 0
        %722 = vmatpush1.bf16.xpose.msra.mxu0 0
        %723 = vmatprep.subr.bf16.mxu0 0
        %724 = vmatpush1.bf16.xpose.msra.mxu0 0
        %725 = vmatprep.subr.bf16.mxu0 0
        %726 = vmatpush1.bf16.xpose.msra.mxu0 0
        %727 = vmatprep.subr.bf16.mxu0 0
        %728 = vmatpush1.bf16.xpose.msra.mxu0 0
        %729 = vmatprep.subr.bf16.mxu0 0
        %730 = vmatpush1.bf16.xpose.msra.mxu0 %v713
        %731 = vmatprep.subr.bf16.mxu0 0
        %732 = vmatpush2.bf16.xpose.msra.mxu0 0
        %733 = vmatprep.subr.bf16.mxu0 0
        %734 = vmatpush2.bf16.xpose.msra.mxu0 0
        %735 = vmatprep.subr.bf16.mxu0 0
        %736 = vmatpush2.bf16.xpose.msra.mxu0 0
        %737 = vmatprep.subr.bf16.mxu0 0
        %738 = vmatpush2.bf16.xpose.msra.mxu0 0
        %739 = vmatprep.subr.bf16.mxu0 0
        %740 = vmatpush2.bf16.xpose.msra.mxu0 0
        %741 = vmatprep.subr.bf16.mxu0 0
        %742 = vmatpush2.bf16.xpose.msra.mxu0 0
        %743 = vmatprep.subr.bf16.mxu0 0
        %744 = vmatpush2.bf16.xpose.msra.mxu0 0
        %745 = vmatprep.subr.bf16.mxu0 0
        %746 = vmatpush2.bf16.xpose.msra.mxu0 0
        %747 = vmatprep.mubr.bf16.mxu0 0
        %748 = vmatmul.mubr.bf16.gmra.mxu0 %v710
        %v749 = vpop.f32.mrf.mxu0
        %v750 = vadd.f32 0.0, %v749
        %v751 = vpop.f32.mrf.mxu0
        %v752 = vpop.f32.mrf.mxu0
        %v753 = vpop.f32.mrf.mxu0
        %754 = vdwg.mxu0
        %v755 = vsel %vm708, %v750, -inf
        %756 = vmax.xlane.f32.xlu0 %v755
        %v757 = vpop.xlane.xlu0 %756
        %v758 = vsub.f32 %v750, %v757
        %v759 = vmul.f32 %v758, 1.442695
        %v760 = vpow.pop %v759
        %v761 = vsel %vm708, %v760, 0.0
        %762 = vadd.xlane.f32.xlu0 %v761
        %v763 = vpop.xlane.xlu0 %762
        %v764 = vrcp.pop %v763
        %v765 = vmul.f32 %v760, %v764
        %v766 = vpack.c.bf16 %v765, %v765
        %v768 = vsel %vm708, %v766, 0
        %vm770 = vcmask 1043456
        %v772 = vsel %vm770, %v707, 0
        %774 = vmatprep.subr.bf16.mxu0 0
        %775 = vmatpush1.bf16.msra.mxu0 0
        %776 = vmatprep.subr.bf16.mxu0 0
        %777 = vmatpush1.bf16.msra.mxu0 0
        %778 = vmatprep.subr.bf16.mxu0 0
        %779 = vmatpush1.bf16.msra.mxu0 0
        %780 = vmatprep.subr.bf16.mxu0 0
        %781 = vmatpush1.bf16.msra.mxu0 0
        %782 = vmatprep.subr.bf16.mxu0 0
        %783 = vmatpush1.bf16.msra.mxu0 0
        %784 = vmatprep.subr.bf16.mxu0 0
        %785 = vmatpush1.bf16.msra.mxu0 0
        %786 = vmatprep.subr.bf16.mxu0 0
        %787 = vmatpush1.bf16.msra.mxu0 0
        %788 = vmatprep.subr.bf16.mxu0 0
        %789 = vmatpush1.bf16.msra.mxu0 %v772
        %790 = vmatprep.subr.bf16.mxu0 0
        %791 = vmatpush2.bf16.msra.mxu0 0
        %792 = vmatprep.subr.bf16.mxu0 0
        %793 = vmatpush2.bf16.msra.mxu0 0
        %794 = vmatprep.subr.bf16.mxu0 0
        %795 = vmatpush2.bf16.msra.mxu0 0
        %796 = vmatprep.subr.bf16.mxu0 0
        %797 = vmatpush2.bf16.msra.mxu0 0
        %798 = vmatprep.subr.bf16.mxu0 0
        %799 = vmatpush2.bf16.msra.mxu0 0
        %800 = vmatprep.subr.bf16.mxu0 0
        %801 = vmatpush2.bf16.msra.mxu0 0
        %802 = vmatprep.subr.bf16.mxu0 0
        %803 = vmatpush2.bf16.msra.mxu0 0
        %804 = vmatprep.subr.bf16.mxu0 0
        %805 = vmatpush2.bf16.msra.mxu0 0
        %806 = vmatprep.mubr.bf16.mxu0 0
        %807 = vmatmul.mubr.bf16.gmra.mxu0 %v768
        %v808 = vpop.f32.mrf.mxu0
        %v809 = vadd.f32 0.0, %v808
        %v810 = vpop.f32.mrf.mxu0
        %v811 = vpop.f32.mrf.mxu0
        %v812 = vpop.f32.mrf.mxu0
        %813 = vdwg.mxu0
        %v814 = vpack.c.bf16 %v809, %v809
        %vm815 = vcmask 60416
        %816 = vst.msk [vmem:[#allocation2] sm:$0xf] %vm815, %v814
        %818 = vrot.lane.b32.xlu0 %v705, 120
        %v819 = vpop.permute.xlu0 %818
        %821 = vrot.lane.b32.xlu0 %v706, 120
        %v822 = vpop.permute.xlu0 %821
        %v824 = vsel %vm708, %v819, 0
        %v827 = vsel %vm708, %v822, 0
        %829 = vmatprep.subr.bf16.mxu0 0
        %830 = vmatpush1.bf16.xpose.msra.mxu0 0
        %831 = vmatprep.subr.bf16.mxu0 0
        %832 = vmatpush1.bf16.xpose.msra.mxu0 0
        %833 = vmatprep.subr.bf16.mxu0 0
        %834 = vmatpush1.bf16.xpose.msra.mxu0 0
        %835 = vmatprep.subr.bf16.mxu0 0
        %836 = vmatpush1.bf16.xpose.msra.mxu0 0
        %837 = vmatprep.subr.bf16.mxu0 0
        %838 = vmatpush1.bf16.xpose.msra.mxu0 0
        %839 = vmatprep.subr.bf16.mxu0 0
        %840 = vmatpush1.bf16.xpose.msra.mxu0 0
        %841 = vmatprep.subr.bf16.mxu0 0
        %842 = vmatpush1.bf16.xpose.msra.mxu0 0
        %843 = vmatprep.subr.bf16.mxu0 0
        %844 = vmatpush1.bf16.xpose.msra.mxu0 %v827
        %845 = vmatprep.subr.bf16.mxu0 0
        %846 = vmatpush2.bf16.xpose.msra.mxu0 0
        %847 = vmatprep.subr.bf16.mxu0 0
        %848 = vmatpush2.bf16.xpose.msra.mxu0 0
        %849 = vmatprep.subr.bf16.mxu0 0
        %850 = vmatpush2.bf16.xpose.msra.mxu0 0
        %851 = vmatprep.subr.bf16.mxu0 0
        %852 = vmatpush2.bf16.xpose.msra.mxu0 0
        %853 = vmatprep.subr.bf16.mxu0 0
        %854 = vmatpush2.bf16.xpose.msra.mxu0 0
        %855 = vmatprep.subr.bf16.mxu0 0
        %856 = vmatpush2.bf16.xpose.msra.mxu0 0
        %857 = vmatprep.subr.bf16.mxu0 0
        %858 = vmatpush2.bf16.xpose.msra.mxu0 0
        %859 = vmatprep.subr.bf16.mxu0 0
        %860 = vmatpush2.bf16.xpose.msra.mxu0 0
        %861 = vmatprep.mubr.bf16.mxu0 0
        %862 = vmatmul.mubr.bf16.gmra.mxu0 %v824
        %v863 = vpop.f32.mrf.mxu0
        %v864 = vadd.f32 0.0, %v863
        %v865 = vpop.f32.mrf.mxu0
        %v866 = vpop.f32.mrf.mxu0
        %v867 = vpop.f32.mrf.mxu0
        %868 = vdwg.mxu0
        %v869 = vsel %vm708, %v864, -inf
        %870 = vmax.xlane.f32.xlu0 %v869
        %v871 = vpop.xlane.xlu0 %870
        %v872 = vsub.f32 %v864, %v871
        %v873 = vmul.f32 %v872, 1.442695
        %v874 = vpow.pop %v873
        %v875 = vsel %vm708, %v874, 0.0
        %876 = vadd.xlane.f32.xlu0 %v875
        %v877 = vpop.xlane.xlu0 %876
        %v878 = vrcp.pop %v877
        %v879 = vmul.f32 %v874, %v878
        %v880 = vpack.c.bf16 %v879, %v879
        %882 = vrot.lane.b32.xlu0 %v707, 120
        %v883 = vpop.permute.xlu0 %882
        %v885 = vsel %vm708, %v880, 0
        %v888 = vsel %vm770, %v883, 0
        %890 = vmatprep.subr.bf16.mxu0 0
        %891 = vmatpush1.bf16.msra.mxu0 0
        %892 = vmatprep.subr.bf16.mxu0 0
        %893 = vmatpush1.bf16.msra.mxu0 0
        %894 = vmatprep.subr.bf16.mxu0 0
        %895 = vmatpush1.bf16.msra.mxu0 0
        %896 = vmatprep.subr.bf16.mxu0 0
        %897 = vmatpush1.bf16.msra.mxu0 0
        %898 = vmatprep.subr.bf16.mxu0 0
        %899 = vmatpush1.bf16.msra.mxu0 0
        %900 = vmatprep.subr.bf16.mxu0 0
        %901 = vmatpush1.bf16.msra.mxu0 0
        %902 = vmatprep.subr.bf16.mxu0 0
        %903 = vmatpush1.bf16.msra.mxu0 0
        %904 = vmatprep.subr.bf16.mxu0 0
        %905 = vmatpush1.bf16.msra.mxu0 %v888
        %906 = vmatprep.subr.bf16.mxu0 0
        %907 = vmatpush2.bf16.msra.mxu0 0
        %908 = vmatprep.subr.bf16.mxu0 0
        %909 = vmatpush2.bf16.msra.mxu0 0
        %910 = vmatprep.subr.bf16.mxu0 0
        %911 = vmatpush2.bf16.msra.mxu0 0
        %912 = vmatprep.subr.bf16.mxu0 0
        %913 = vmatpush2.bf16.msra.mxu0 0
        %914 = vmatprep.subr.bf16.mxu0 0
        %915 = vmatpush2.bf16.msra.mxu0 0
        %916 = vmatprep.subr.bf16.mxu0 0
        %917 = vmatpush2.bf16.msra.mxu0 0
        %918 = vmatprep.subr.bf16.mxu0 0
        %919 = vmatpush2.bf16.msra.mxu0 0
        %920 = vmatprep.subr.bf16.mxu0 0
        %921 = vmatpush2.bf16.msra.mxu0 0
        %922 = vmatprep.mubr.bf16.mxu0 0
        %923 = vmatmul.mubr.bf16.gmra.mxu0 %v885
        %v924 = vpop.f32.mrf.mxu0
        %v925 = vadd.f32 0.0, %v924
        %v926 = vpop.f32.mrf.mxu0
        %v927 = vpop.f32.mrf.mxu0
        %v928 = vpop.f32.mrf.mxu0
        %929 = vdwg.mxu0
        %v930 = vpack.c.bf16 %v925, %v925
        %v932 = vunpack.c.l.b16 %v930
        %v933 = vpack.c.b16 %v932, %v932
        %934 = vrot.lane.b32.xlu0 %v933, 8
        %v935 = vpop.permute.xlu0 %934
        %vm937 = vcmask 126016
        %938 = vst.msk [vmem:[#allocation2] sm:$0xf] %vm937, %v935
        %939 = vrot.lane.b32.xlu0 %v705, 112
        %v940 = vpop.permute.xlu0 %939
        %941 = vrot.lane.b32.xlu0 %v706, 112
        %v942 = vpop.permute.xlu0 %941
        %v944 = vsel %vm708, %v940, 0
        %v947 = vsel %vm708, %v942, 0
        %949 = vmatprep.subr.bf16.mxu0 0
        %950 = vmatpush1.bf16.xpose.msra.mxu0 0
        %951 = vmatprep.subr.bf16.mxu0 0
        %952 = vmatpush1.bf16.xpose.msra.mxu0 0
        %953 = vmatprep.subr.bf16.mxu0 0
        %954 = vmatpush1.bf16.xpose.msra.mxu0 0
        %955 = vmatprep.subr.bf16.mxu0 0
        %956 = vmatpush1.bf16.xpose.msra.mxu0 0
        %957 = vmatprep.subr.bf16.mxu0 0
        %958 = vmatpush1.bf16.xpose.msra.mxu0 0
        %959 = vmatprep.subr.bf16.mxu0 0
        %960 = vmatpush1.bf16.xpose.msra.mxu0 0
        %961 = vmatprep.subr.bf16.mxu0 0
        %962 = vmatpush1.bf16.xpose.msra.mxu0 0
        %963 = vmatprep.subr.bf16.mxu0 0
        %964 = vmatpush1.bf16.xpose.msra.mxu0 %v947
        %965 = vmatprep.subr.bf16.mxu0 0
        %966 = vmatpush2.bf16.xpose.msra.mxu0 0
        %967 = vmatprep.subr.bf16.mxu0 0
        %968 = vmatpush2.bf16.xpose.msra.mxu0 0
        %969 = vmatprep.subr.bf16.mxu0 0
        %970 = vmatpush2.bf16.xpose.msra.mxu0 0
        %971 = vmatprep.subr.bf16.mxu0 0
        %972 = vmatpush2.bf16.xpose.msra.mxu0 0
        %973 = vmatprep.subr.bf16.mxu0 0
        %974 = vmatpush2.bf16.xpose.msra.mxu0 0
        %975 = vmatprep.subr.bf16.mxu0 0
        %976 = vmatpush2.bf16.xpose.msra.mxu0 0
        %977 = vmatprep.subr.bf16.mxu0 0
        %978 = vmatpush2.bf16.xpose.msra.mxu0 0
        %979 = vmatprep.subr.bf16.mxu0 0
        %980 = vmatpush2.bf16.xpose.msra.mxu0 0
        %981 = vmatprep.mubr.bf16.mxu0 0
        %982 = vmatmul.mubr.bf16.gmra.mxu0 %v944
        %v983 = vpop.f32.mrf.mxu0
        %v984 = vadd.f32 0.0, %v983
        %v985 = vpop.f32.mrf.mxu0
        %v986 = vpop.f32.mrf.mxu0
        %v987 = vpop.f32.mrf.mxu0
        %988 = vdwg.mxu0
        %v989 = vsel %vm708, %v984, -inf
        %990 = vmax.xlane.f32.xlu0 %v989
        %v991 = vpop.xlane.xlu0 %990
        %v992 = vsub.f32 %v984, %v991
        %v993 = vmul.f32 %v992, 1.442695
        %v994 = vpow.pop %v993
        %v995 = vsel %vm708, %v994, 0.0
        %996 = vadd.xlane.f32.xlu0 %v995
        %v997 = vpop.xlane.xlu0 %996
        %v998 = vrcp.pop %v997
        %v999 = vmul.f32 %v994, %v998
        %v1000 = vpack.c.bf16 %v999, %v999
        %1001 = vrot.lane.b32.xlu0 %v707, 112
        %v1002 = vpop.permute.xlu0 %1001
        %v1004 = vsel %vm708, %v1000, 0
        %v1007 = vsel %vm770, %v1002, 0
        %1009 = vmatprep.subr.bf16.mxu0 0
        %1010 = vmatpush1.bf16.msra.mxu0 0
        %1011 = vmatprep.subr.bf16.mxu0 0
        %1012 = vmatpush1.bf16.msra.mxu0 0
        %1013 = vmatprep.subr.bf16.mxu0 0
        %1014 = vmatpush1.bf16.msra.mxu0 0
        %1015 = vmatprep.subr.bf16.mxu0 0
        %1016 = vmatpush1.bf16.msra.mxu0 0
        %1017 = vmatprep.subr.bf16.mxu0 0
        %1018 = vmatpush1.bf16.msra.mxu0 0
        %1019 = vmatprep.subr.bf16.mxu0 0
        %1020 = vmatpush1.bf16.msra.mxu0 0
        %1021 = vmatprep.subr.bf16.mxu0 0
        %1022 = vmatpush1.bf16.msra.mxu0 0
        %1023 = vmatprep.subr.bf16.mxu0 0
        %1024 = vmatpush1.bf16.msra.mxu0 %v1007
        %1025 = vmatprep.subr.bf16.mxu0 0
        %1026 = vmatpush2.bf16.msra.mxu0 0
        %1027 = vmatprep.subr.bf16.mxu0 0
        %1028 = vmatpush2.bf16.msra.mxu0 0
        %1029 = vmatprep.subr.bf16.mxu0 0
        %1030 = vmatpush2.bf16.msra.mxu0 0
        %1031 = vmatprep.subr.bf16.mxu0 0
        %1032 = vmatpush2.bf16.msra.mxu0 0
        %1033 = vmatprep.subr.bf16.mxu0 0
        %1034 = vmatpush2.bf16.msra.mxu0 0
        %1035 = vmatprep.subr.bf16.mxu0 0
        %1036 = vmatpush2.bf16.msra.mxu0 0
        %1037 = vmatprep.subr.bf16.mxu0 0
        %1038 = vmatpush2.bf16.msra.mxu0 0
        %1039 = vmatprep.subr.bf16.mxu0 0
        %1040 = vmatpush2.bf16.msra.mxu0 0
        %1041 = vmatprep.mubr.bf16.mxu0 0
        %1042 = vmatmul.mubr.bf16.gmra.mxu0 %v1004
        %v1043 = vpop.f32.mrf.mxu0
        %v1044 = vadd.f32 0.0, %v1043
        %v1045 = vpop.f32.mrf.mxu0
        %v1046 = vpop.f32.mrf.mxu0
        %v1047 = vpop.f32.mrf.mxu0
        %1048 = vdwg.mxu0
        %v1049 = vpack.c.bf16 %v1044, %v1044
        %v1051 = vunpack.c.l.b16 %v1049
        %v1052 = vpack.c.b16 %v1051, %v1051
        %1053 = vrot.lane.b32.xlu0 %v1052, 16
        %v1054 = vpop.permute.xlu0 %1053
        %vm1056 = vcmask 191616
        %1057 = vst.msk [vmem:[#allocation2] sm:$0xf] %vm1056, %v1054
        %1058 = vrot.lane.b32.xlu0 %v705, 104
        %v1059 = vpop.permute.xlu0 %1058
        %1060 = vrot.lane.b32.xlu0 %v706, 104
        %v1061 = vpop.permute.xlu0 %1060
        %v1063 = vsel %vm708, %v1059, 0
        %v1066 = vsel %vm708, %v1061, 0
        %1068 = vmatprep.subr.bf16.mxu0 0
        %1069 = vmatpush1.bf16.xpose.msra.mxu0 0
        %1070 = vmatprep.subr.bf16.mxu0 0
        %1071 = vmatpush1.bf16.xpose.msra.mxu0 0
        %1072 = vmatprep.subr.bf16.mxu0 0
        %1073 = vmatpush1.bf16.xpose.msra.mxu0 0
        %1074 = vmatprep.subr.bf16.mxu0 0
        %1075 = vmatpush1.bf16.xpose.msra.mxu0 0
        %1076 = vmatprep.subr.bf16.mxu0 0
        %1077 = vmatpush1.bf16.xpose.msra.mxu0 0
        %1078 = vmatprep.subr.bf16.mxu0 0
        %1079 = vmatpush1.bf16.xpose.msra.mxu0 0
        %1080 = vmatprep.subr.bf16.mxu0 0
        %1081 = vmatpush1.bf16.xpose.msra.mxu0 0
        %1082 = vmatprep.subr.bf16.mxu0 0
        %1083 = vmatpush1.bf16.xpose.msra.mxu0 %v1066
        %1084 = vmatprep.subr.bf16.mxu0 0
        %1085 = vmatpush2.bf16.xpose.msra.mxu0 0
        %1086 = vmatprep.subr.bf16.mxu0 0
        %1087 = vmatpush2.bf16.xpose.msra.mxu0 0
        %1088 = vmatprep.subr.bf16.mxu0 0
        %1089 = vmatpush2.bf16.xpose.msra.mxu0 0
        %1090 = vmatprep.subr.bf16.mxu0 0
        %1091 = vmatpush2.bf16.xpose.msra.mxu0 0
        %1092 = vmatprep.subr.bf16.mxu0 0
        %1093 = vmatpush2.bf16.xpose.msra.mxu0 0
        %1094 = vmatprep.subr.bf16.mxu0 0
        %1095 = vmatpush2.bf16.xpose.msra.mxu0 0
        %1096 = vmatprep.subr.bf16.mxu0 0
        %1097 = vmatpush2.bf16.xpose.msra.mxu0 0
        %1098 = vmatprep.subr.bf16.mxu0 0
        %1099 = vmatpush2.bf16.xpose.msra.mxu0 0
        %1100 = vmatprep.mubr.bf16.mxu0 0
        %1101 = vmatmul.mubr.bf16.gmra.mxu0 %v1063
        %v1102 = vpop.f32.mrf.mxu0
        %v1103 = vadd.f32 0.0, %v1102
        %v1104 = vpop.f32.mrf.mxu0
        %v1105 = vpop.f32.mrf.mxu0
        %v1106 = vpop.f32.mrf.mxu0
        %1107 = vdwg.mxu0
        %v1108 = vsel %vm708, %v1103, -inf
        %1109 = vmax.xlane.f32.xlu0 %v1108
        %v1110 = vpop.xlane.xlu0 %1109
        %v1111 = vsub.f32 %v1103, %v1110
        %v1112 = vmul.f32 %v1111, 1.442695
        %v1113 = vpow.pop %v1112
        %v1114 = vsel %vm708, %v1113, 0.0
        %1115 = vadd.xlane.f32.xlu0 %v1114
        %v1116 = vpop.xlane.xlu0 %1115
        %v1117 = vrcp.pop %v1116
        %v1118 = vmul.f32 %v1113, %v1117
        %v1119 = vpack.c.bf16 %v1118, %v1118
        %1120 = vrot.lane.b32.xlu0 %v707, 104
        %v1121 = vpop.permute.xlu0 %1120
        %v1123 = vsel %vm708, %v1119, 0
        %v1126 = vsel %vm770, %v1121, 0
        %1128 = vmatprep.subr.bf16.mxu0 0
        %1129 = vmatpush1.bf16.msra.mxu0 0
        %1130 = vmatprep.subr.bf16.mxu0 0
        %1131 = vmatpush1.bf16.msra.mxu0 0
        %1132 = vmatprep.subr.bf16.mxu0 0
        %1133 = vmatpush1.bf16.msra.mxu0 0
        %1134 = vmatprep.subr.bf16.mxu0 0
        %1135 = vmatpush1.bf16.msra.mxu0 0
        %1136 = vmatprep.subr.bf16.mxu0 0
        %1137 = vmatpush1.bf16.msra.mxu0 0
        %1138 = vmatprep.subr.bf16.mxu0 0
        %1139 = vmatpush1.bf16.msra.mxu0 0
        %1140 = vmatprep.subr.bf16.mxu0 0
        %1141 = vmatpush1.bf16.msra.mxu0 0
        %1142 = vmatprep.subr.bf16.mxu0 0
        %1143 = vmatpush1.bf16.msra.mxu0 %v1126
        %1144 = vmatprep.subr.bf16.mxu0 0
        %1145 = vmatpush2.bf16.msra.mxu0 0
        %1146 = vmatprep.subr.bf16.mxu0 0
        %1147 = vmatpush2.bf16.msra.mxu0 0
        %1148 = vmatprep.subr.bf16.mxu0 0
        %1149 = vmatpush2.bf16.msra.mxu0 0
        %1150 = vmatprep.subr.bf16.mxu0 0
        %1151 = vmatpush2.bf16.msra.mxu0 0
        %1152 = vmatprep.subr.bf16.mxu0 0
        %1153 = vmatpush2.bf16.msra.mxu0 0
        %1154 = vmatprep.subr.bf16.mxu0 0
        %1155 = vmatpush2.bf16.msra.mxu0 0
        %1156 = vmatprep.subr.bf16.mxu0 0
        %1157 = vmatpush2.bf16.msra.mxu0 0
        %1158 = vmatprep.subr.bf16.mxu0 0
        %1159 = vmatpush2.bf16.msra.mxu0 0
        %1160 = vmatprep.mubr.bf16.mxu0 0
        %1161 = vmatmul.mubr.bf16.gmra.mxu0 %v1123
        %v1162 = vpop.f32.mrf.mxu0
        %v1163 = vadd.f32 0.0, %v1162
        %v1164 = vpop.f32.mrf.mxu0
        %v1165 = vpop.f32.mrf.mxu0
        %v1166 = vpop.f32.mrf.mxu0
        %1167 = vdwg.mxu0
        %v1168 = vpack.c.bf16 %v1163, %v1163
        %v1170 = vunpack.c.l.b16 %v1168
        %v1171 = vpack.c.b16 %v1170, %v1170
        %1172 = vrot.lane.b32.xlu0 %v1171, 24
        %v1173 = vpop.permute.xlu0 %1172
        %vm1175 = vcmask 257216
        %1176 = vst.msk [vmem:[#allocation2] sm:$0xf] %vm1175, %v1173
        %v1177 = vld [vmem:[#allocation2] sm:$0xf]
        %v1178 = vld [vmem:[%s8] sm:$0xf]
        %v1179 = vld [vmem:[%s8 + $0x4] sm:$0xf]
        %v1180 = vld [vmem:[%s8 + $0x8] sm:$0xf]
        %v1181 = vld [vmem:[%s8 + $0xc] sm:$0xf]
        %v1186 = vunpack.c.l.b16 %v1178
        %v1187 = vunpack.c.l.b16 %v1179
        %v1188 = vunpack.c.l.b16 %v1180
        %v1189 = vunpack.c.l.b16 %v1181
        %v1190 = vpack.c.b16 %v1187, %v1186
        %v1191 = vpack.c.b16 %v1189, %v1188
        %v1195 = vsel %vm411, %v1177, 0
        %1197 = vmatprep.subr.bf16.mxu0 0
        %1198 = vmatpush1.bf16.msra.mxu0 0
        %1199 = vmatprep.subr.bf16.mxu0 0
        %1200 = vmatpush1.bf16.msra.mxu0 0
        %1201 = vmatprep.subr.bf16.mxu0 0
        %1202 = vmatpush1.bf16.msra.mxu0 0
        %1203 = vmatprep.subr.bf16.mxu0 0
        %1204 = vmatpush1.bf16.msra.mxu0 0
        %1205 = vmatprep.subr.bf16.mxu0 0
        %1206 = vmatpush1.bf16.msra.mxu0 0
        %1207 = vmatprep.subr.bf16.mxu0 0
        %1208 = vmatpush1.bf16.msra.mxu0 0
        %1209 = vmatprep.subr.bf16.mxu0 0
        %1210 = vmatpush1.bf16.msra.mxu0 %v1191
        %1211 = vmatprep.subr.bf16.mxu0 0
        %1212 = vmatpush1.bf16.msra.mxu0 %v1190
        %1213 = vmatprep.subr.bf16.mxu0 0
        %1214 = vmatpush2.bf16.msra.mxu0 0
        %1215 = vmatprep.subr.bf16.mxu0 0
        %1216 = vmatpush2.bf16.msra.mxu0 0
        %1217 = vmatprep.subr.bf16.mxu0 0
        %1218 = vmatpush2.bf16.msra.mxu0 0
        %1219 = vmatprep.subr.bf16.mxu0 0
        %1220 = vmatpush2.bf16.msra.mxu0 0
        %1221 = vmatprep.subr.bf16.mxu0 0
        %1222 = vmatpush2.bf16.msra.mxu0 0
        %1223 = vmatprep.subr.bf16.mxu0 0
        %1224 = vmatpush2.bf16.msra.mxu0 0
        %1225 = vmatprep.subr.bf16.mxu0 0
        %1226 = vmatpush2.bf16.msra.mxu0 0
        %1227 = vmatprep.subr.bf16.mxu0 0
        %1228 = vmatpush2.bf16.msra.mxu0 0
        %1229 = vmatprep.mubr.bf16.mxu0 0
        %1230 = vmatmul.mubr.bf16.gmra.mxu0 %v1195
        %v1231 = vpop.f32.mrf.mxu0
        %v1232 = vadd.f32 0.0, %v1231
        %v1233 = vpop.f32.mrf.mxu0
        %v1234 = vpop.f32.mrf.mxu0
        %v1235 = vpop.f32.mrf.mxu0
        %1236 = vdwg.mxu0
        %v1237 = vadd.f32 %v409, %v1232
        %1238 = vst.msk [vmem:[%s396] sm:$0xff] %vm411, %v1237
        %v1239 = vmul.f32 %v1237, %v1237
        %v1240 = vsel %vm411, %v1239, 0.0
        %1241 = vadd.xlane.f32.xlu0 %v1240
        %v1242 = vpop.xlane.xlu0 %1241
        %v1243 = vmul.f32 %v1242, %v415
        %v1244 = vrsqrt.pop %v1243
        %v1245 = vmul.f32 %v1237, %v1244
        %v1246 = vld [vmem:[#allocation3] sm:$0x1]
        %v1248 = vlaneseq
        %v1249 = vshrl.u32 %v1248, 7
        %v1250 = vsub.s32 0, %v1249
        %v1251 = vrot.slane %v1246, %v1250
        %v1253 = vmul.f32 %v1245, %v1251
        %v1254 = vpack.c.bf16 %v1253, %v1253
        %vm1255 = vcmask 257024
        %1256 = vst.msk [vmem:[%s403] sm:$0xf] %vm1255, %v1254
        %s1257 = sand.u32 %s232, 1
        %s1258 = scalar_lea.sflag [#allocation5], %s1257
        %s1259 = sand.u32 %s232, 1
        %s1260 = smul.addr %s1259, 8
        %s1261 = scalar_lea.vmem [#allocation9], %s1260
        %s1262 = sand.u32 %s258, 1
        %s1263 = scalar_lea.sflag [#allocation11], %s1262
        %s1264 = sand.u32 %s258, 1
        %s1265 = smul.addr %s1264, 4
        %s1266 = scalar_lea.vmem [#allocation10], %s1265
        // Predicated region
        $region69: #{tpu_custom_call.1} parent=55 // pred_check
          %p1267 = pneg %p242
        $region70: #{tpu_custom_call.1} parent=55 // pred_check_branch
          %1269 = sbr.rel (%p1267) target = $region72
        $region71: #{tpu_custom_call.1} parent=55 // pred_region
          %s1271 = ssub.s32 128, 128
          %1272 = vsyncadd %s1258, %s1271
          %s1273 = smul.addr %s30, 128
          %s1274 = scalar_lea.hbm %s9, %s1273
          %s1276 = sshll.u32 %s1261, 4
          %s1277 = int_to_ptr.vmem [resolvable:$true] %s1276
          %1279 = dma.vmem_to_hbm [thread:$0]  %s1277, 128, %s1274, %s1258
        $region72: #{tpu_custom_call.1} parent=55 // pred_fallthru
          _
        // Predicated region
        $region73: #{tpu_custom_call.1} parent=55 // pred_check
          %p1280 = pneg %p268
        $region74: #{tpu_custom_call.1} parent=55 // pred_check_branch
          %1282 = sbr.rel (%p1280) target = $region76
        $region75: #{tpu_custom_call.1} parent=55 // pred_region
          %s1284 = ssub.s32 64, 64
          %1285 = vsyncadd %s1263, %s1284
          %s1286 = smul.addr %s30, 64
          %s1287 = scalar_lea.hbm %s10, %s1286
          %s1289 = sshll.u32 %s1266, 4
          %s1290 = int_to_ptr.vmem [resolvable:$true] %s1289
          %1292 = dma.vmem_to_hbm [thread:$0]  %s1290, 64, %s1287, %s1263
        $region76: #{tpu_custom_call.1} parent=55 // pred_fallthru
          _
      $region56: #{tpu_custom_call.1} parent=5 // pred_fallthru
        _
      %p1293 = scmp.le.s32.totalorder 2, %s25
      // Predicated region
      $region77: #{tpu_custom_call.1} parent=5 // pred_check
        %p1294 = pneg %p1293
      $region78: #{tpu_custom_call.1} parent=5 // pred_check_branch
        %1296 = sbr.rel (%p1294) target = $region80
      $region79: #{tpu_custom_call.1} parent=5 // pred_region
        %s1297 = ssub.s32 %s25, 2
        // Predicated region
        $region81: #{tpu_custom_call.1} parent=79 // pred_check
          %p1298 = pneg %p248
        $region82: #{tpu_custom_call.1} parent=79 // pred_check_branch
          %1300 = sbr.rel (%p1298) target = $region84
        $region83: #{tpu_custom_call.1} parent=79 // pred_region
          %s1301 = sand.u32 %s233, 1
          %s1302 = scalar_lea.sflag [#allocation5], %s1301
          %s1303 = sand.u32 %s233, 1
          %s1304 = smul.addr %s1303, 8
          %s1305 = scalar_lea.vmem [#allocation9], %s1304
          %1306 = dma.done %s1302, 128
        $region84: #{tpu_custom_call.1} parent=79 // pred_fallthru
          _
        // Predicated region
        $region85: #{tpu_custom_call.1} parent=79 // pred_check
          %p1307 = pneg %p274
        $region86: #{tpu_custom_call.1} parent=79 // pred_check_branch
          %1309 = sbr.rel (%p1307) target = $region88
        $region87: #{tpu_custom_call.1} parent=79 // pred_region
          %s1310 = sand.u32 %s259, 1
          %s1311 = scalar_lea.sflag [#allocation11], %s1310
          %s1312 = sand.u32 %s259, 1
          %s1313 = smul.addr %s1312, 4
          %s1314 = scalar_lea.vmem [#allocation10], %s1313
          %1315 = dma.done %s1311, 64
        $region88: #{tpu_custom_call.1} parent=79 // pred_fallthru
          _
      $region80: #{tpu_custom_call.1} parent=5 // pred_fallthru
        _
    $region6: #{tpu_custom_call.1} parent=1 // loop_footer
      %s29 = sadd.s32 1, %s25
    $region7: #{tpu_custom_call.1} parent=1 // loop_footer_branch
      %24 = sbr.rel target = $region3
    $region8: #{tpu_custom_call.1} parent=1 // loop_exit
      _
    %1316 = vsyncpa [#allocation4], 1
    %s1317 = scalar_lea.sflag [#allocation4], 1
    %1318 = vsyncpa %s1317, 1
    %1319 = vsyncpa [#allocation7], 1
    %1320 = vsyncpa [#allocation5], 1
    %s1321 = scalar_lea.sflag [#allocation5], 1
    %1322 = vsyncpa %s1321, 1
    %1323 = vsyncpa [#allocation11], 1
    %s1324 = scalar_lea.sflag [#allocation11], 1
    %1325 = vsyncpa %s1324, 1

</llo_original>
